<compile_context>
chip_gen: v7x
topology: tpu7x:2x2x1
jax: 0.10.0
libtpu: 0.0.40
codegen_flags: <defaults>
</compile_context>

<pallas_src>
import functools

import jax
import jax.numpy as jnp
import numpy as np
from jax.experimental import pallas as pl
from jax.experimental.pallas import tpu as pltpu

MATMUL_DTYPE = jnp.bfloat16     # MXU-operand dtype; accumulation stays f32


def _round_up(x, m):
    return ((x + m - 1) // m) * m


def _device_kind():
    try:
        return jax.devices()[0].device_kind.lower()
    except Exception:
        return ""


def _vmem_limit_bytes():
    """Generation-aware scoped-VMEM limit (None -> keep the compiler default)."""
    kind = _device_kind()
    if "v2" in kind or "v3" in kind:
        return None                       # small-VMEM parts: compiler default
    if "7" in kind:                        # v7x: 64 MiB physical per TensorCore
        return 48 * 1024 * 1024
    return 96 * 1024 * 1024                # v4 / v5e / v6e: 128 MiB physical


def _pick_batch_tile(B):
    """(batch_tile, padded_B) — generation aware."""
    kind = _device_kind()
    two_cores = "7" in kind                        # v7x: 2 TensorCores / chip
    wide_mxu = two_cores or "v6" in kind           # 256-wide MXU on v6e / v7x
    Bp = _round_up(B, 8)
    if wide_mxu and Bp >= 512:
        bt = 256                                   # fill the 2x256x256 MXU
    elif Bp >= 256:
        bt = 128
    elif two_cores and Bp > 64:
        bt = 64        # keep >= 2 batch tiles so both v7x TensorCores get work
    else:
        bt = min(Bp, 128)
    return bt, _round_up(Bp, bt)


def _pick_chunk(T, batch_tile, Hp, D):
    """Timesteps per recurrence grid step, capped by an explicit VMEM budget."""
    limit = _vmem_limit_bytes() or (32 * 1024 * 1024)
    budget = min(16 * 1024 * 1024, limit // 3)
    # Double-buffered per-timestep blocks in the recurrence kernel:
    #   x block (bf16) + hidden-out block (bf16).
    per_step = 2 * batch_tile * (D + Hp) * 2
    max_chunk = max(8, (budget // per_step) // 8 * 8)
    return int(min(32, max_chunk, _round_up(T, 8)))


# ----------------------------------------------------------------------------
# Kernel 1: tiled linear  (M, K) @ (K, N) + (1, N) -> (M, N) f32
# Only used for the fused item+event FC heads.
# ----------------------------------------------------------------------------
def _linear_kernel(x_ref, w_ref, b_ref, o_ref):
    o_ref[...] = (
        jnp.dot(x_ref[...], w_ref[...], preferred_element_type=jnp.float32)
        + b_ref[...]
    ).astype(o_ref.dtype)


def tiled_linear(x, w, b, *, tm_max=512, tn_max=1024):
    """Tiled matmul + bias with an (M, N) grid and lane-dense output tiles."""
    M, K = x.shape
    _, N = w.shape
    tm = min(_round_up(M, 8), tm_max)
    tn = min(_round_up(N, 128), tn_max)
    Mp, Np = _round_up(M, tm), _round_up(N, tn)

    x_p = jnp.pad(x.astype(MATMUL_DTYPE), ((0, Mp - M), (0, 0)))
    w_p = jnp.pad(w, ((0, 0), (0, Np - N)))
    b_p = jnp.pad(b, ((0, 0), (0, Np - N)))

    out = pl.pallas_call(
        _linear_kernel,
        out_shape=jax.ShapeDtypeStruct((Mp, Np), jnp.float32),
        grid_spec=pltpu.PrefetchScalarGridSpec(
            num_scalar_prefetch=0,
            grid=(Mp // tm, Np // tn),
            in_specs=[
                pl.BlockSpec((tm, K), lambda i, j: (i, 0)),   # activations
                pl.BlockSpec((K, tn), lambda i, j: (0, j)),   # weights
                pl.BlockSpec((1, tn), lambda i, j: (0, j)),   # bias
            ],
            out_specs=pl.BlockSpec((tm, tn), lambda i, j: (i, j)),
        ),
        compiler_params=pltpu.CompilerParams(
            dimension_semantics=("parallel", "parallel"),
            vmem_limit_bytes=_vmem_limit_bytes(),
        ),
    )(x_p, w_p, b_p)
    return out[:M, :N]


# ----------------------------------------------------------------------------
# Kernel 2: chunked GRU recurrence with the input projection fused in.
# Grid = (batch tiles [parallel], T/chunk [arbitrary]).  W_ih / W_hh / biases
# are resident (constant index maps); the hidden state carries in f32 VMEM
# scratch across the time axis; hidden states are written out in bf16.
# ----------------------------------------------------------------------------
def _gru_chunk_kernel(x_ref, w_ih_ref, b_ih_ref, w_hh_ref, b_hn_ref,
                      out_ref, h_ref):
    t_blk = pl.program_id(1)

    @pl.when(t_blk == 0)
    def _():
        h_ref[...] = jnp.zeros_like(h_ref)

    chunk = x_ref.shape[0]
    bb = x_ref.shape[1]
    hp = h_ref.shape[1]

    w_ih = w_ih_ref[...]                                   # (D, 3Hp)  bf16
    w_hh = w_hh_ref[...]                                   # (Hp, 3Hp) bf16
    # Pre-broadcast the biases ONCE per chunk (JAX does not CSE broadcasts,
    # so doing this inside the unrolled loop would re-emit it every step).
    b_ih = jnp.broadcast_to(b_ih_ref[...], (bb, 3 * hp))   # r/z hidden biases folded in
    b_hn = jnp.broadcast_to(b_hn_ref[...], (bb, hp))

    h0 = h_ref[...]

    def step(t, carry):
        h_f32, h_lo = carry                                # f32 carry + bf16 copy
        # Input projection fused here (no gi HBM round trip).  It does not
        # depend on h, so it sits off the serial MXU->VPU/EUP->MXU chain.
        gi = jnp.dot(x_ref[t], w_ih, preferred_element_type=jnp.float32) + b_ih
        gh = jnp.dot(h_lo, w_hh, preferred_element_type=jnp.float32)
        # Gate slices are Hp(=k*128)-aligned -> plain vreg selects, no shuffles.
        r = jax.nn.sigmoid(gi[:, 0:hp] + gh[:, 0:hp])
        z = jax.nn.sigmoid(gi[:, hp:2 * hp] + gh[:, hp:2 * hp])
        n = jnp.tanh(gi[:, 2 * hp:3 * hp] + r * (gh[:, 2 * hp:3 * hp] + b_hn))
        h_new = n + z * (h_f32 - n)                        # == (1-z)*n + z*h
        h_lo_new = h_new.astype(out_ref.dtype)             # single cast feeds the
        out_ref[t] = h_lo_new                               # store AND the next dot
        return (h_new, h_lo_new)

    # Partial unroll keeps LLO scheduler visibility without a vreg-spill cliff.
    unroll = 8 if chunk > 8 else True
    h_fin, _ = jax.lax.fori_loop(0, chunk, step,
                                 (h0, h0.astype(out_ref.dtype)), unroll=unroll)
    h_ref[...] = h_fin


def gru_fused_recurrence(x, w_ih, b_ih, w_hh, b_hn, *, batch_tile, chunk):
    """x: (Tp, Bp, D) bf16, time-major  ->  hidden states (Tp, Bp, Hp) bf16."""
    Tp, Bp, D = x.shape
    Hp = w_hh.shape[0]
    return pl.pallas_call(
        _gru_chunk_kernel,
        out_shape=jax.ShapeDtypeStruct((Tp, Bp, Hp), MATMUL_DTYPE),
        grid_spec=pltpu.PrefetchScalarGridSpec(
            num_scalar_prefetch=0,
            grid=(Bp // batch_tile, Tp // chunk),
            in_specs=[
                pl.BlockSpec((chunk, batch_tile, D), lambda b, t: (t, b, 0)),
                # Resident weights/biases: constant index map -> DMA'd once.
                # (pipeline_mode=pl.Buffered(1) would drop their 2nd buffer;
                #  omitted for JAX-version robustness and accounted for in the
                #  VMEM chunk budget instead.)
                pl.BlockSpec((D, 3 * Hp), lambda b, t: (0, 0)),
                pl.BlockSpec((1, 3 * Hp), lambda b, t: (0, 0)),
                pl.BlockSpec((Hp, 3 * Hp), lambda b, t: (0, 0)),
                pl.BlockSpec((1, Hp), lambda b, t: (0, 0)),
            ],
            out_specs=pl.BlockSpec((chunk, batch_tile, Hp),
                                   lambda b, t: (t, b, 0)),
            scratch_shapes=[pltpu.VMEM((batch_tile, Hp), jnp.float32)],
        ),
        compiler_params=pltpu.CompilerParams(
            # batch tiles may be split across TensorCores; time is the serial
            # recurrence axis.
            dimension_semantics=("parallel", "arbitrary"),
            vmem_limit_bytes=_vmem_limit_bytes(),
        ),
    )(x, w_ih, b_ih, w_hh, b_hn)


# ----------------------------------------------------------------------------
# One-time parameter preparation (outside the jitted forward).
# ----------------------------------------------------------------------------
def _pad_gates(w, H, Hp):
    """(K, 3H) -> (K, 3Hp): gate g moves to columns [g*Hp, g*Hp + H), rest 0."""
    if Hp == H:
        return w
    K = w.shape[0]
    out = jnp.zeros((K, 3 * Hp), w.dtype)
    for g in range(3):
        out = out.at[:, g * Hp:g * Hp + H].set(w[:, g * H:(g + 1) * H])
    return out


def prepare_params(params, hidden_size):
    """Lane-aligned gate layout, bf16 MXU operands, fused FC-head weights.
    Padded gate/hidden columns stay exactly zero through the recurrence."""
    H = hidden_size
    Hp = _round_up(H, 128)

    w_ih = _pad_gates(params["gru_w_ih"], H, Hp).astype(MATMUL_DTYPE)   # (D, 3Hp)
    w_hh = _pad_gates(params["gru_w_hh"], H, Hp)
    w_hh = jnp.pad(w_hh, ((0, Hp - H), (0, 0))).astype(MATMUL_DTYPE)    # (Hp, 3Hp)

    b_ih = _pad_gates(params["gru_b_ih"], H, Hp)                        # (1, 3Hp)
    b_hh = _pad_gates(params["gru_b_hh"], H, Hp)                        # (1, 3Hp)
    # Fold the r/z hidden biases into the input bias (they only ever appear as
    # gi + gh); only the n-gate hidden bias must stay inside r * (gh_n + b_hn).
    b_ih = b_ih.at[:, :2 * Hp].add(b_hh[:, :2 * Hp])
    b_hn = b_hh[:, 2 * Hp:]

    w_heads = jnp.concatenate(
        [jnp.pad(params["item_fc_w"], ((0, Hp - H), (0, 0))),
         jnp.pad(params["event_fc_w"], ((0, Hp - H), (0, 0)))],
        axis=1).astype(MATMUL_DTYPE)                                    # (Hp, Ni+Ne)
    b_heads = jnp.concatenate([params["item_fc_b"], params["event_fc_b"]], axis=1)

    return {
        # bf16 embedding tables: the gather directly yields MXU-ready operands.
        "item_embedding": params["item_embedding"].astype(MATMUL_DTYPE),
        "event_embedding": params["event_embedding"].astype(MATMUL_DTYPE),
        "w_ih": w_ih, "b_ih": b_ih, "w_hh": w_hh, "b_hn": b_hn,
        "w_heads": w_heads, "b_heads": b_heads,
    }


# ----------------------------------------------------------------------------
# Full forward pass
# ----------------------------------------------------------------------------
@functools.partial(jax.jit,
                   static_argnames=("hidden_size", "num_items", "num_events"))
def gru_item_event_forward(prepped, item_seq, event_seq, *,
                           hidden_size, num_items, num_events):
    B, T = item_seq.shape
    Hp = prepped["w_hh"].shape[0]
    Ni, Ne = num_items, num_events
    Ntot = Ni + Ne

    # --- Embedding gather, produced TIME-MAJOR directly (only the tiny int32
    # index arrays are transposed), already in bf16. ---
    item_emb = jnp.take(prepped["item_embedding"], item_seq.T, axis=0)    # (T, B, E)
    event_emb = jnp.take(prepped["event_embedding"], event_seq.T, axis=0)  # (T, B, E)
    x = jnp.concatenate([item_emb, event_emb], axis=-1)                    # (T, B, 2E)
    D = x.shape[-1]

    # --- Generation-aware tiling + padding (pad time at the END so padded
    # timesteps never corrupt valid hidden states). ---
    batch_tile, Bp = _pick_batch_tile(B)
    chunk = _pick_chunk(T, batch_tile, Hp, D)
    Tp = _round_up(T, chunk)
    x = jnp.pad(x, ((0, Tp - T), (0, Bp - B), (0, 0)))

    # --- Fused input-projection + GRU recurrence (bf16 hidden states out). ---
    out_tbh = gru_fused_recurrence(
        x, prepped["w_ih"], prepped["b_ih"], prepped["w_hh"], prepped["b_hn"],
        batch_tile=batch_tile, chunk=chunk)                                # (Tp, Bp, Hp)

    # --- Fused item+event FC heads.  The matmul is row-order agnostic, so
    # transpose whichever of {hidden (bf16), logits (f32)} moves fewer bytes.
    # TODO(synk): fuse the heads into the GRU kernel epilogue when the
    # Hp x (Ni+Ne) bf16 head weights comfortably fit VMEM (skips this HBM pass).
    if Hp * 2 <= Ntot * 4:
        # Hidden rows are cheaper to transpose -> batch-major head matmul.
        h = jnp.transpose(out_tbh[:T, :B], (1, 0, 2)).reshape(B * T, Hp)
        logits = tiled_linear(h, prepped["w_heads"], prepped["b_heads"])
        item_out = logits[:, :Ni].reshape(B, T, Ni)
        event_out = logits[:, Ni:Ntot].reshape(B, T, Ne)
    else:
        # Logit rows are cheaper to transpose -> time-major head matmul.
        logits = tiled_linear(out_tbh.reshape(Tp * Bp, Hp),
                              prepped["w_heads"], prepped["b_heads"])
        logits = jnp.transpose(logits.reshape(Tp, Bp, Ntot)[:T, :B], (1, 0, 2))
        item_out = logits[..., :Ni]
        event_out = logits[..., Ni:Ntot]
    return item_out, event_out


# ----------------------------------------------------------------------------
# Deterministic parameter init (shapes match the PyTorch module, stored
# pre-transposed for the "x @ W" convention; gate order (r, z, n)).
# ----------------------------------------------------------------------------
def init_params(key, num_items, num_events, embedding_dim, hidden_size):
    keys = jax.random.split(key, 10)
    E, H = embedding_dim, hidden_size
    u = lambda k, shape, s: jax.random.uniform(k, shape, jnp.float32, -s, s)
    s_gru = 1.0 / np.sqrt(H)
    return {
        "item_embedding": jax.random.normal(keys[0], (num_items, E), jnp.float32),
        "event_embedding": jax.random.normal(keys[1], (num_events, E), jnp.float32),
        "gru_w_ih": u(keys[2], (2 * E, 3 * H), s_gru),
        "gru_w_hh": u(keys[3], (H, 3 * H), s_gru),
        "gru_b_ih": u(keys[4], (1, 3 * H), s_gru),
        "gru_b_hh": u(keys[5], (1, 3 * H), s_gru),
        "item_fc_w": u(keys[6], (H, num_items), 1.0 / np.sqrt(H)),
        "item_fc_b": u(keys[7], (1, num_items), 1.0 / np.sqrt(H)),
        "event_fc_w": u(keys[8], (H, num_events), 1.0 / np.sqrt(H)),
        "event_fc_b": u(keys[9], (1, num_events), 1.0 / np.sqrt(H)),
    }


# ----------------------------------------------------------------------------
# Pure-JAX f32 reference (correctness check against the kernel path)
# ----------------------------------------------------------------------------
def reference_forward(params, item_seq, event_seq, hidden_size):
    item_emb = jnp.take(params["item_embedding"], item_seq, axis=0)
    event_emb = jnp.take(params["event_embedding"], event_seq, axis=0)
    x = jnp.concatenate([item_emb, event_emb], axis=2)
    B, T, _ = x.shape
    H = hidden_size

    def step(h, xt):
        gi = xt @ params["gru_w_ih"] + params["gru_b_ih"]
        gh = h @ params["gru_w_hh"] + params["gru_b_hh"]
        r = jax.nn.sigmoid(gi[:, :H] + gh[:, :H])
        z = jax.nn.sigmoid(gi[:, H:2 * H] + gh[:, H:2 * H])
        n = jnp.tanh(gi[:, 2 * H:] + r * gh[:, 2 * H:])
        h_new = (1.0 - z) * n + z * h
        return h_new, h_new

    h0 = jnp.zeros((B, H), jnp.float32)
    _, out_tbh = jax.lax.scan(step, h0, jnp.transpose(x, (1, 0, 2)))
    out = jnp.transpose(out_tbh, (1, 0, 2)).reshape(B * T, H)
    item_out = out @ params["item_fc_w"] + params["item_fc_b"]
    event_out = out @ params["event_fc_w"] + params["event_fc_b"]
    return (item_out.reshape(B, T, -1), event_out.reshape(B, T, -1))


def _check(params, item_seq, event_seq, *, hidden, num_items, num_events):
    prepped = prepare_params(params, hidden)
    item_out, event_out = gru_item_event_forward(
        prepped, item_seq, event_seq,
        hidden_size=hidden, num_items=num_items, num_events=num_events)
    jax.block_until_ready((item_out, event_out))

    ref_item, ref_event = reference_forward(params, item_seq, event_seq, hidden)
    B, T = item_seq.shape
    assert item_out.shape == (B, T, num_items)
    assert event_out.shape == (B, T, num_events)
    # bf16 MXU operands vs the pure-f32 reference -> loose-ish tolerance.
    np.testing.assert_allclose(np.asarray(item_out), np.asarray(ref_item),
                               rtol=4e-2, atol=4e-2)
    np.testing.assert_allclose(np.asarray(event_out), np.asarray(ref_event),
                               rtol=4e-2, atol=4e-2)


if __name__ == "__main__":
    key = jax.random.PRNGKey(0)

    # Case 1: small "nice" shapes (exercises the batch-major head path).
    NUM_ITEMS, NUM_EVENTS, EMBED, HIDDEN, B, T = 64, 8, 16, 32, 2, 8
    k0, k1, k2, key = jax.random.split(key, 4)
    params = init_params(k0, NUM_ITEMS, NUM_EVENTS, EMBED, HIDDEN)
    item_seq = jax.random.randint(k1, (B, T), 0, NUM_ITEMS, dtype=jnp.int32)
    event_seq = jax.random.randint(k2, (B, T), 0, NUM_EVENTS, dtype=jnp.int32)
    _check(params, item_seq, event_seq, hidden=HIDDEN,
           num_items=NUM_ITEMS, num_events=NUM_EVENTS)

    # Case 2: ragged shapes (T not a chunk multiple, B not a sublane multiple,
    # H not a lane multiple) exercising padding + the time-major head path.
    NUM_ITEMS2, NUM_EVENTS2, EMBED2, HIDDEN2, B2, T2 = 50, 6, 8, 40, 3, 13
    k3, k4, k5, key = jax.random.split(key, 4)
    params2 = init_params(k3, NUM_ITEMS2, NUM_EVENTS2, EMBED2, HIDDEN2)
    item_seq2 = jax.random.randint(k4, (B2, T2), 0, NUM_ITEMS2, dtype=jnp.int32)
    event_seq2 = jax.random.randint(k5, (B2, T2), 0, NUM_EVENTS2, dtype=jnp.int32)
    _check(params2, item_seq2, event_seq2, hidden=HIDDEN2,
           num_items=NUM_ITEMS2, num_events=NUM_EVENTS2)

    print("KERNEL_OK")
</pallas_src>

<mosaic_0001>
module attributes {stable_mosaic.version = 11 : i64} {
  func.func @_gru_chunk_kernel(%arg0: i32, %arg1: i32, %arg2: memref<8x8x32xbf16, #tpu.memory_space<vmem>>, %arg3: memref<32x384xbf16, #tpu.memory_space<vmem>>, %arg4: memref<1x384xf32, #tpu.memory_space<vmem>>, %arg5: memref<128x384xbf16, #tpu.memory_space<vmem>>, %arg6: memref<1x128xf32, #tpu.memory_space<vmem>>, %arg7: memref<8x8x128xbf16, #tpu.memory_space<vmem>>, %arg8: memref<8x128xf32, #tpu.memory_space<vmem>>) attributes {dimension_semantics = [#tpu.dimension_semantics<parallel>, #tpu.dimension_semantics<arbitrary>], iteration_bounds = array<i64: 1, 1>, scalar_prefetch = 0 : i64, scratch_operands = 1 : i64, tpu.core_type = #tpu.core_type<tc>, window_params = [{transform_indices = @transform_0, window_bounds = array<i64: 8, 8, 32>}, {pipeline_mode = #tpu.pipeline_mode<synchronous>, transform_indices = @transform_1, window_bounds = array<i64: 32, 384>}, {pipeline_mode = #tpu.pipeline_mode<synchronous>, transform_indices = @transform_2, window_bounds = array<i64: 1, 384>}, {pipeline_mode = #tpu.pipeline_mode<synchronous>, transform_indices = @transform_3, window_bounds = array<i64: 128, 384>}, {pipeline_mode = #tpu.pipeline_mode<synchronous>, transform_indices = @transform_4, window_bounds = array<i64: 1, 128>}, {transform_indices = @transform_5, window_bounds = array<i64: 8, 8, 128>}]} {
    %c0_i32 = arith.constant 0 : i32
    %0 = arith.cmpi eq, %arg1, %c0_i32 : i32
    %1 = arith.extui %0 : i1 to i32
    %c0_i32_0 = arith.constant 0 : i32
    %2 = arith.cmpi ne, %1, %c0_i32_0 : i32
    scf.if %2 {
      %cst_76 = arith.constant 0.000000e+00 : f32
      %302 = vector.broadcast %cst_76 : f32 to vector<8x128xf32>
      %c0_77 = arith.constant 0 : index
      %c0_78 = arith.constant 0 : index
      %303 = vector.load %arg8[%c0_77, %c0_78] : memref<8x128xf32, #tpu.memory_space<vmem>>, vector<8x128xf32>
      tpu.vector_store %arg8[%c0_77, %c0_78], %302 {strides = array<i32>} : memref<8x128xf32, #tpu.memory_space<vmem>>, vector<8x128xf32>,
    } else {
    }
    %c0 = arith.constant 0 : index
    %c0_1 = arith.constant 0 : index
    %3 = vector.load %arg3[%c0, %c0_1] : memref<32x384xbf16, #tpu.memory_space<vmem>>, vector<32x384xbf16>
    %c0_2 = arith.constant 0 : index
    %c0_3 = arith.constant 0 : index
    %4 = vector.load %arg5[%c0_2, %c0_3] : memref<128x384xbf16, #tpu.memory_space<vmem>>, vector<128x384xbf16>
    %c0_4 = arith.constant 0 : index
    %c0_5 = arith.constant 0 : index
    %5 = vector.load %arg4[%c0_4, %c0_5] : memref<1x384xf32, #tpu.memory_space<vmem>>, vector<1x384xf32>
    %6 = vector.shape_cast %5 : vector<1x384xf32> to vector<1x384xf32>
    %7 = vector.broadcast %6 : vector<1x384xf32> to vector<8x384xf32>
    %c0_6 = arith.constant 0 : index
    %c0_7 = arith.constant 0 : index
    %8 = vector.load %arg6[%c0_6, %c0_7] : memref<1x128xf32, #tpu.memory_space<vmem>>, vector<1x128xf32>
    %9 = vector.shape_cast %8 : vector<1x128xf32> to vector<1x128xf32>
    %10 = vector.broadcast %9 : vector<1x128xf32> to vector<8x128xf32>
    %c0_8 = arith.constant 0 : index
    %c0_9 = arith.constant 0 : index
    %11 = vector.load %arg8[%c0_8, %c0_9] : memref<8x128xf32, #tpu.memory_space<vmem>>, vector<8x128xf32>
    %12 = arith.truncf %11 : vector<8x128xf32> to vector<8x128xbf16>
    %c0_i32_10 = arith.constant 0 : i32
    %13 = arith.index_cast %c0_i32_10 : i32 to index
    %c0_11 = arith.constant 0 : index
    %c0_12 = arith.constant 0 : index
    %14 = vector.load %arg2[%13, %c0_11, %c0_12] : memref<8x8x32xbf16, #tpu.memory_space<vmem>>, vector<1x8x32xbf16>
    %15 = vector.shape_cast %14 : vector<1x8x32xbf16> to vector<8x32xbf16>
    %cst = arith.constant dense<0.000000e+00> : vector<8x384xf32>
    %16 = tpu.matmul %15, %3, %cst {dimension_numbers = #tpu.dot_dimension_numbers<[1], [0], [0], [1], [0, 0, 1, 1], [], []>} : vector<8x32xbf16>, vector<32x384xbf16>, vector<8x384xf32> -> vector<8x384xf32>
    %17 = arith.addf %16, %7 : vector<8x384xf32>
    %cst_13 = arith.constant dense<0.000000e+00> : vector<8x384xf32>
    %18 = tpu.matmul %12, %4, %cst_13 {dimension_numbers = #tpu.dot_dimension_numbers<[1], [0], [0], [1], [0, 0, 1, 1], [], []>} : vector<8x128xbf16>, vector<128x384xbf16>, vector<8x384xf32> -> vector<8x384xf32>
    %19 = vector.extract_strided_slice %17 {offsets = [0, 0], sizes = [8, 128], strides = [1, 1]} : vector<8x384xf32> to vector<8x128xf32>
    %20 = vector.extract_strided_slice %18 {offsets = [0, 0], sizes = [8, 128], strides = [1, 1]} : vector<8x384xf32> to vector<8x128xf32>
    %21 = arith.addf %19, %20 : vector<8x128xf32>
    %22 = arith.negf %21 : vector<8x128xf32>
    %23 = math.exp %22 : vector<8x128xf32>
    %cst_14 = arith.constant 1.000000e+00 : f32
    %24 = vector.broadcast %cst_14 : f32 to vector<8x128xf32>
    %25 = arith.addf %24, %23 : vector<8x128xf32>
    %26 = arith.divf %24, %25 : vector<8x128xf32>
    %27 = vector.extract_strided_slice %17 {offsets = [0, 128], sizes = [8, 128], strides = [1, 1]} : vector<8x384xf32> to vector<8x128xf32>
    %28 = vector.extract_strided_slice %18 {offsets = [0, 128], sizes = [8, 128], strides = [1, 1]} : vector<8x384xf32> to vector<8x128xf32>
    %29 = arith.addf %27, %28 : vector<8x128xf32>
    %30 = arith.negf %29 : vector<8x128xf32>
    %31 = math.exp %30 : vector<8x128xf32>
    %cst_15 = arith.constant 1.000000e+00 : f32
    %32 = vector.broadcast %cst_15 : f32 to vector<8x128xf32>
    %33 = arith.addf %32, %31 : vector<8x128xf32>
    %34 = arith.divf %32, %33 : vector<8x128xf32>
    %35 = vector.extract_strided_slice %17 {offsets = [0, 256], sizes = [8, 128], strides = [1, 1]} : vector<8x384xf32> to vector<8x128xf32>
    %36 = vector.extract_strided_slice %18 {offsets = [0, 256], sizes = [8, 128], strides = [1, 1]} : vector<8x384xf32> to vector<8x128xf32>
    %37 = arith.addf %36, %10 : vector<8x128xf32>
    %38 = arith.mulf %26, %37 : vector<8x128xf32>
    %39 = arith.addf %35, %38 : vector<8x128xf32>
    %40 = math.tanh %39 : vector<8x128xf32>
    %41 = arith.subf %11, %40 : vector<8x128xf32>
    %42 = arith.mulf %34, %41 : vector<8x128xf32>
    %43 = arith.addf %40, %42 : vector<8x128xf32>
    %44 = arith.truncf %43 : vector<8x128xf32> to vector<8x128xbf16>
    %45 = arith.index_cast %c0_i32_10 : i32 to index
    %c0_16 = arith.constant 0 : index
    %c0_17 = arith.constant 0 : index
    %46 = vector.load %arg7[%45, %c0_16, %c0_17] : memref<8x8x128xbf16, #tpu.memory_space<vmem>>, vector<1x8x128xbf16>
    %47 = vector.shape_cast %46 : vector<1x8x128xbf16> to vector<8x128xbf16>
    %48 = vector.shape_cast %44 : vector<8x128xbf16> to vector<1x8x128xbf16>
    tpu.vector_store %arg7[%45, %c0_16, %c0_17], %48 {strides = array<i32>} : memref<8x8x128xbf16, #tpu.memory_space<vmem>>, vector<1x8x128xbf16>,
    %c1_i32 = arith.constant 1 : i32
    %49 = arith.index_cast %c1_i32 : i32 to index
    %c0_18 = arith.constant 0 : index
    %c0_19 = arith.constant 0 : index
    %50 = vector.load %arg2[%49, %c0_18, %c0_19] : memref<8x8x32xbf16, #tpu.memory_space<vmem>>, vector<1x8x32xbf16>
    %51 = vector.shape_cast %50 : vector<1x8x32xbf16> to vector<8x32xbf16>
    %cst_20 = arith.constant dense<0.000000e+00> : vector<8x384xf32>
    %52 = tpu.matmul %51, %3, %cst_20 {dimension_numbers = #tpu.dot_dimension_numbers<[1], [0], [0], [1], [0, 0, 1, 1], [], []>} : vector<8x32xbf16>, vector<32x384xbf16>, vector<8x384xf32> -> vector<8x384xf32>
    %53 = arith.addf %52, %7 : vector<8x384xf32>
    %cst_21 = arith.constant dense<0.000000e+00> : vector<8x384xf32>
    %54 = tpu.matmul %44, %4, %cst_21 {dimension_numbers = #tpu.dot_dimension_numbers<[1], [0], [0], [1], [0, 0, 1, 1], [], []>} : vector<8x128xbf16>, vector<128x384xbf16>, vector<8x384xf32> -> vector<8x384xf32>
    %55 = vector.extract_strided_slice %53 {offsets = [0, 0], sizes = [8, 128], strides = [1, 1]} : vector<8x384xf32> to vector<8x128xf32>
    %56 = vector.extract_strided_slice %54 {offsets = [0, 0], sizes = [8, 128], strides = [1, 1]} : vector<8x384xf32> to vector<8x128xf32>
    %57 = arith.addf %55, %56 : vector<8x128xf32>
    %58 = arith.negf %57 : vector<8x128xf32>
    %59 = math.exp %58 : vector<8x128xf32>
    %cst_22 = arith.constant 1.000000e+00 : f32
    %60 = vector.broadcast %cst_22 : f32 to vector<8x128xf32>
    %61 = arith.addf %60, %59 : vector<8x128xf32>
    %62 = arith.divf %60, %61 : vector<8x128xf32>
    %63 = vector.extract_strided_slice %53 {offsets = [0, 128], sizes = [8, 128], strides = [1, 1]} : vector<8x384xf32> to vector<8x128xf32>
    %64 = vector.extract_strided_slice %54 {offsets = [0, 128], sizes = [8, 128], strides = [1, 1]} : vector<8x384xf32> to vector<8x128xf32>
    %65 = arith.addf %63, %64 : vector<8x128xf32>
    %66 = arith.negf %65 : vector<8x128xf32>
    %67 = math.exp %66 : vector<8x128xf32>
    %cst_23 = arith.constant 1.000000e+00 : f32
    %68 = vector.broadcast %cst_23 : f32 to vector<8x128xf32>
    %69 = arith.addf %68, %67 : vector<8x128xf32>
    %70 = arith.divf %68, %69 : vector<8x128xf32>
    %71 = vector.extract_strided_slice %53 {offsets = [0, 256], sizes = [8, 128], strides = [1, 1]} : vector<8x384xf32> to vector<8x128xf32>
    %72 = vector.extract_strided_slice %54 {offsets = [0, 256], sizes = [8, 128], strides = [1, 1]} : vector<8x384xf32> to vector<8x128xf32>
    %73 = arith.addf %72, %10 : vector<8x128xf32>
    %74 = arith.mulf %62, %73 : vector<8x128xf32>
    %75 = arith.addf %71, %74 : vector<8x128xf32>
    %76 = math.tanh %75 : vector<8x128xf32>
    %77 = arith.subf %43, %76 : vector<8x128xf32>
    %78 = arith.mulf %70, %77 : vector<8x128xf32>
    %79 = arith.addf %76, %78 : vector<8x128xf32>
    %80 = arith.truncf %79 : vector<8x128xf32> to vector<8x128xbf16>
    %81 = arith.index_cast %c1_i32 : i32 to index
    %c0_24 = arith.constant 0 : index
    %c0_25 = arith.constant 0 : index
    %82 = vector.load %arg7[%81, %c0_24, %c0_25] : memref<8x8x128xbf16, #tpu.memory_space<vmem>>, vector<1x8x128xbf16>
    %83 = vector.shape_cast %82 : vector<1x8x128xbf16> to vector<8x128xbf16>
    %84 = vector.shape_cast %80 : vector<8x128xbf16> to vector<1x8x128xbf16>
    tpu.vector_store %arg7[%81, %c0_24, %c0_25], %84 {strides = array<i32>} : memref<8x8x128xbf16, #tpu.memory_space<vmem>>, vector<1x8x128xbf16>,
    %c2_i32 = arith.constant 2 : i32
    %85 = arith.index_cast %c2_i32 : i32 to index
    %c0_26 = arith.constant 0 : index
    %c0_27 = arith.constant 0 : index
    %86 = vector.load %arg2[%85, %c0_26, %c0_27] : memref<8x8x32xbf16, #tpu.memory_space<vmem>>, vector<1x8x32xbf16>
    %87 = vector.shape_cast %86 : vector<1x8x32xbf16> to vector<8x32xbf16>
    %cst_28 = arith.constant dense<0.000000e+00> : vector<8x384xf32>
    %88 = tpu.matmul %87, %3, %cst_28 {dimension_numbers = #tpu.dot_dimension_numbers<[1], [0], [0], [1], [0, 0, 1, 1], [], []>} : vector<8x32xbf16>, vector<32x384xbf16>, vector<8x384xf32> -> vector<8x384xf32>
    %89 = arith.addf %88, %7 : vector<8x384xf32>
    %cst_29 = arith.constant dense<0.000000e+00> : vector<8x384xf32>
    %90 = tpu.matmul %80, %4, %cst_29 {dimension_numbers = #tpu.dot_dimension_numbers<[1], [0], [0], [1], [0, 0, 1, 1], [], []>} : vector<8x128xbf16>, vector<128x384xbf16>, vector<8x384xf32> -> vector<8x384xf32>
    %91 = vector.extract_strided_slice %89 {offsets = [0, 0], sizes = [8, 128], strides = [1, 1]} : vector<8x384xf32> to vector<8x128xf32>
    %92 = vector.extract_strided_slice %90 {offsets = [0, 0], sizes = [8, 128], strides = [1, 1]} : vector<8x384xf32> to vector<8x128xf32>
    %93 = arith.addf %91, %92 : vector<8x128xf32>
    %94 = arith.negf %93 : vector<8x128xf32>
    %95 = math.exp %94 : vector<8x128xf32>
    %cst_30 = arith.constant 1.000000e+00 : f32
    %96 = vector.broadcast %cst_30 : f32 to vector<8x128xf32>
    %97 = arith.addf %96, %95 : vector<8x128xf32>
    %98 = arith.divf %96, %97 : vector<8x128xf32>
    %99 = vector.extract_strided_slice %89 {offsets = [0, 128], sizes = [8, 128], strides = [1, 1]} : vector<8x384xf32> to vector<8x128xf32>
    %100 = vector.extract_strided_slice %90 {offsets = [0, 128], sizes = [8, 128], strides = [1, 1]} : vector<8x384xf32> to vector<8x128xf32>
    %101 = arith.addf %99, %100 : vector<8x128xf32>
    %102 = arith.negf %101 : vector<8x128xf32>
    %103 = math.exp %102 : vector<8x128xf32>
    %cst_31 = arith.constant 1.000000e+00 : f32
    %104 = vector.broadcast %cst_31 : f32 to vector<8x128xf32>
    %105 = arith.addf %104, %103 : vector<8x128xf32>
    %106 = arith.divf %104, %105 : vector<8x128xf32>
    %107 = vector.extract_strided_slice %89 {offsets = [0, 256], sizes = [8, 128], strides = [1, 1]} : vector<8x384xf32> to vector<8x128xf32>
    %108 = vector.extract_strided_slice %90 {offsets = [0, 256], sizes = [8, 128], strides = [1, 1]} : vector<8x384xf32> to vector<8x128xf32>
    %109 = arith.addf %108, %10 : vector<8x128xf32>
    %110 = arith.mulf %98, %109 : vector<8x128xf32>
    %111 = arith.addf %107, %110 : vector<8x128xf32>
    %112 = math.tanh %111 : vector<8x128xf32>
    %113 = arith.subf %79, %112 : vector<8x128xf32>
    %114 = arith.mulf %106, %113 : vector<8x128xf32>
    %115 = arith.addf %112, %114 : vector<8x128xf32>
    %116 = arith.truncf %115 : vector<8x128xf32> to vector<8x128xbf16>
    %117 = arith.index_cast %c2_i32 : i32 to index
    %c0_32 = arith.constant 0 : index
    %c0_33 = arith.constant 0 : index
    %118 = vector.load %arg7[%117, %c0_32, %c0_33] : memref<8x8x128xbf16, #tpu.memory_space<vmem>>, vector<1x8x128xbf16>
    %119 = vector.shape_cast %118 : vector<1x8x128xbf16> to vector<8x128xbf16>
    %120 = vector.shape_cast %116 : vector<8x128xbf16> to vector<1x8x128xbf16>
    tpu.vector_store %arg7[%117, %c0_32, %c0_33], %120 {strides = array<i32>} : memref<8x8x128xbf16, #tpu.memory_space<vmem>>, vector<1x8x128xbf16>,
    %c3_i32 = arith.constant 3 : i32
    %121 = arith.index_cast %c3_i32 : i32 to index
    %c0_34 = arith.constant 0 : index
    %c0_35 = arith.constant 0 : index
    %122 = vector.load %arg2[%121, %c0_34, %c0_35] : memref<8x8x32xbf16, #tpu.memory_space<vmem>>, vector<1x8x32xbf16>
    %123 = vector.shape_cast %122 : vector<1x8x32xbf16> to vector<8x32xbf16>
    %cst_36 = arith.constant dense<0.000000e+00> : vector<8x384xf32>
    %124 = tpu.matmul %123, %3, %cst_36 {dimension_numbers = #tpu.dot_dimension_numbers<[1], [0], [0], [1], [0, 0, 1, 1], [], []>} : vector<8x32xbf16>, vector<32x384xbf16>, vector<8x384xf32> -> vector<8x384xf32>
    %125 = arith.addf %124, %7 : vector<8x384xf32>
    %cst_37 = arith.constant dense<0.000000e+00> : vector<8x384xf32>
    %126 = tpu.matmul %116, %4, %cst_37 {dimension_numbers = #tpu.dot_dimension_numbers<[1], [0], [0], [1], [0, 0, 1, 1], [], []>} : vector<8x128xbf16>, vector<128x384xbf16>, vector<8x384xf32> -> vector<8x384xf32>
    %127 = vector.extract_strided_slice %125 {offsets = [0, 0], sizes = [8, 128], strides = [1, 1]} : vector<8x384xf32> to vector<8x128xf32>
    %128 = vector.extract_strided_slice %126 {offsets = [0, 0], sizes = [8, 128], strides = [1, 1]} : vector<8x384xf32> to vector<8x128xf32>
    %129 = arith.addf %127, %128 : vector<8x128xf32>
    %130 = arith.negf %129 : vector<8x128xf32>
    %131 = math.exp %130 : vector<8x128xf32>
    %cst_38 = arith.constant 1.000000e+00 : f32
    %132 = vector.broadcast %cst_38 : f32 to vector<8x128xf32>
    %133 = arith.addf %132, %131 : vector<8x128xf32>
    %134 = arith.divf %132, %133 : vector<8x128xf32>
    %135 = vector.extract_strided_slice %125 {offsets = [0, 128], sizes = [8, 128], strides = [1, 1]} : vector<8x384xf32> to vector<8x128xf32>
    %136 = vector.extract_strided_slice %126 {offsets = [0, 128], sizes = [8, 128], strides = [1, 1]} : vector<8x384xf32> to vector<8x128xf32>
    %137 = arith.addf %135, %136 : vector<8x128xf32>
    %138 = arith.negf %137 : vector<8x128xf32>
    %139 = math.exp %138 : vector<8x128xf32>
    %cst_39 = arith.constant 1.000000e+00 : f32
    %140 = vector.broadcast %cst_39 : f32 to vector<8x128xf32>
    %141 = arith.addf %140, %139 : vector<8x128xf32>
    %142 = arith.divf %140, %141 : vector<8x128xf32>
    %143 = vector.extract_strided_slice %125 {offsets = [0, 256], sizes = [8, 128], strides = [1, 1]} : vector<8x384xf32> to vector<8x128xf32>
    %144 = vector.extract_strided_slice %126 {offsets = [0, 256], sizes = [8, 128], strides = [1, 1]} : vector<8x384xf32> to vector<8x128xf32>
    %145 = arith.addf %144, %10 : vector<8x128xf32>
    %146 = arith.mulf %134, %145 : vector<8x128xf32>
    %147 = arith.addf %143, %146 : vector<8x128xf32>
    %148 = math.tanh %147 : vector<8x128xf32>
    %149 = arith.subf %115, %148 : vector<8x128xf32>
    %150 = arith.mulf %142, %149 : vector<8x128xf32>
    %151 = arith.addf %148, %150 : vector<8x128xf32>
    %152 = arith.truncf %151 : vector<8x128xf32> to vector<8x128xbf16>
    %153 = arith.index_cast %c3_i32 : i32 to index
    %c0_40 = arith.constant 0 : index
    %c0_41 = arith.constant 0 : index
    %154 = vector.load %arg7[%153, %c0_40, %c0_41] : memref<8x8x128xbf16, #tpu.memory_space<vmem>>, vector<1x8x128xbf16>
    %155 = vector.shape_cast %154 : vector<1x8x128xbf16> to vector<8x128xbf16>
    %156 = vector.shape_cast %152 : vector<8x128xbf16> to vector<1x8x128xbf16>
    tpu.vector_store %arg7[%153, %c0_40, %c0_41], %156 {strides = array<i32>} : memref<8x8x128xbf16, #tpu.memory_space<vmem>>, vector<1x8x128xbf16>,
    %c4_i32 = arith.constant 4 : i32
    %157 = arith.index_cast %c4_i32 : i32 to index
    %c0_42 = arith.constant 0 : index
    %c0_43 = arith.constant 0 : index
    %158 = vector.load %arg2[%157, %c0_42, %c0_43] : memref<8x8x32xbf16, #tpu.memory_space<vmem>>, vector<1x8x32xbf16>
    %159 = vector.shape_cast %158 : vector<1x8x32xbf16> to vector<8x32xbf16>
    %cst_44 = arith.constant dense<0.000000e+00> : vector<8x384xf32>
    %160 = tpu.matmul %159, %3, %cst_44 {dimension_numbers = #tpu.dot_dimension_numbers<[1], [0], [0], [1], [0, 0, 1, 1], [], []>} : vector<8x32xbf16>, vector<32x384xbf16>, vector<8x384xf32> -> vector<8x384xf32>
    %161 = arith.addf %160, %7 : vector<8x384xf32>
    %cst_45 = arith.constant dense<0.000000e+00> : vector<8x384xf32>
    %162 = tpu.matmul %152, %4, %cst_45 {dimension_numbers = #tpu.dot_dimension_numbers<[1], [0], [0], [1], [0, 0, 1, 1], [], []>} : vector<8x128xbf16>, vector<128x384xbf16>, vector<8x384xf32> -> vector<8x384xf32>
    %163 = vector.extract_strided_slice %161 {offsets = [0, 0], sizes = [8, 128], strides = [1, 1]} : vector<8x384xf32> to vector<8x128xf32>
    %164 = vector.extract_strided_slice %162 {offsets = [0, 0], sizes = [8, 128], strides = [1, 1]} : vector<8x384xf32> to vector<8x128xf32>
    %165 = arith.addf %163, %164 : vector<8x128xf32>
    %166 = arith.negf %165 : vector<8x128xf32>
    %167 = math.exp %166 : vector<8x128xf32>
    %cst_46 = arith.constant 1.000000e+00 : f32
    %168 = vector.broadcast %cst_46 : f32 to vector<8x128xf32>
    %169 = arith.addf %168, %167 : vector<8x128xf32>
    %170 = arith.divf %168, %169 : vector<8x128xf32>
    %171 = vector.extract_strided_slice %161 {offsets = [0, 128], sizes = [8, 128], strides = [1, 1]} : vector<8x384xf32> to vector<8x128xf32>
    %172 = vector.extract_strided_slice %162 {offsets = [0, 128], sizes = [8, 128], strides = [1, 1]} : vector<8x384xf32> to vector<8x128xf32>
    %173 = arith.addf %171, %172 : vector<8x128xf32>
    %174 = arith.negf %173 : vector<8x128xf32>
    %175 = math.exp %174 : vector<8x128xf32>
    %cst_47 = arith.constant 1.000000e+00 : f32
    %176 = vector.broadcast %cst_47 : f32 to vector<8x128xf32>
    %177 = arith.addf %176, %175 : vector<8x128xf32>
    %178 = arith.divf %176, %177 : vector<8x128xf32>
    %179 = vector.extract_strided_slice %161 {offsets = [0, 256], sizes = [8, 128], strides = [1, 1]} : vector<8x384xf32> to vector<8x128xf32>
    %180 = vector.extract_strided_slice %162 {offsets = [0, 256], sizes = [8, 128], strides = [1, 1]} : vector<8x384xf32> to vector<8x128xf32>
    %181 = arith.addf %180, %10 : vector<8x128xf32>
    %182 = arith.mulf %170, %181 : vector<8x128xf32>
    %183 = arith.addf %179, %182 : vector<8x128xf32>
    %184 = math.tanh %183 : vector<8x128xf32>
    %185 = arith.subf %151, %184 : vector<8x128xf32>
    %186 = arith.mulf %178, %185 : vector<8x128xf32>
    %187 = arith.addf %184, %186 : vector<8x128xf32>
    %188 = arith.truncf %187 : vector<8x128xf32> to vector<8x128xbf16>
    %189 = arith.index_cast %c4_i32 : i32 to index
    %c0_48 = arith.constant 0 : index
    %c0_49 = arith.constant 0 : index
    %190 = vector.load %arg7[%189, %c0_48, %c0_49] : memref<8x8x128xbf16, #tpu.memory_space<vmem>>, vector<1x8x128xbf16>
    %191 = vector.shape_cast %190 : vector<1x8x128xbf16> to vector<8x128xbf16>
    %192 = vector.shape_cast %188 : vector<8x128xbf16> to vector<1x8x128xbf16>
    tpu.vector_store %arg7[%189, %c0_48, %c0_49], %192 {strides = array<i32>} : memref<8x8x128xbf16, #tpu.memory_space<vmem>>, vector<1x8x128xbf16>,
    %c5_i32 = arith.constant 5 : i32
    %193 = arith.index_cast %c5_i32 : i32 to index
    %c0_50 = arith.constant 0 : index
    %c0_51 = arith.constant 0 : index
    %194 = vector.load %arg2[%193, %c0_50, %c0_51] : memref<8x8x32xbf16, #tpu.memory_space<vmem>>, vector<1x8x32xbf16>
    %195 = vector.shape_cast %194 : vector<1x8x32xbf16> to vector<8x32xbf16>
    %cst_52 = arith.constant dense<0.000000e+00> : vector<8x384xf32>
    %196 = tpu.matmul %195, %3, %cst_52 {dimension_numbers = #tpu.dot_dimension_numbers<[1], [0], [0], [1], [0, 0, 1, 1], [], []>} : vector<8x32xbf16>, vector<32x384xbf16>, vector<8x384xf32> -> vector<8x384xf32>
    %197 = arith.addf %196, %7 : vector<8x384xf32>
    %cst_53 = arith.constant dense<0.000000e+00> : vector<8x384xf32>
    %198 = tpu.matmul %188, %4, %cst_53 {dimension_numbers = #tpu.dot_dimension_numbers<[1], [0], [0], [1], [0, 0, 1, 1], [], []>} : vector<8x128xbf16>, vector<128x384xbf16>, vector<8x384xf32> -> vector<8x384xf32>
    %199 = vector.extract_strided_slice %197 {offsets = [0, 0], sizes = [8, 128], strides = [1, 1]} : vector<8x384xf32> to vector<8x128xf32>
    %200 = vector.extract_strided_slice %198 {offsets = [0, 0], sizes = [8, 128], strides = [1, 1]} : vector<8x384xf32> to vector<8x128xf32>
    %201 = arith.addf %199, %200 : vector<8x128xf32>
    %202 = arith.negf %201 : vector<8x128xf32>
    %203 = math.exp %202 : vector<8x128xf32>
    %cst_54 = arith.constant 1.000000e+00 : f32
    %204 = vector.broadcast %cst_54 : f32 to vector<8x128xf32>
    %205 = arith.addf %204, %203 : vector<8x128xf32>
    %206 = arith.divf %204, %205 : vector<8x128xf32>
    %207 = vector.extract_strided_slice %197 {offsets = [0, 128], sizes = [8, 128], strides = [1, 1]} : vector<8x384xf32> to vector<8x128xf32>
    %208 = vector.extract_strided_slice %198 {offsets = [0, 128], sizes = [8, 128], strides = [1, 1]} : vector<8x384xf32> to vector<8x128xf32>
    %209 = arith.addf %207, %208 : vector<8x128xf32>
    %210 = arith.negf %209 : vector<8x128xf32>
    %211 = math.exp %210 : vector<8x128xf32>
    %cst_55 = arith.constant 1.000000e+00 : f32
    %212 = vector.broadcast %cst_55 : f32 to vector<8x128xf32>
    %213 = arith.addf %212, %211 : vector<8x128xf32>
    %214 = arith.divf %212, %213 : vector<8x128xf32>
    %215 = vector.extract_strided_slice %197 {offsets = [0, 256], sizes = [8, 128], strides = [1, 1]} : vector<8x384xf32> to vector<8x128xf32>
    %216 = vector.extract_strided_slice %198 {offsets = [0, 256], sizes = [8, 128], strides = [1, 1]} : vector<8x384xf32> to vector<8x128xf32>
    %217 = arith.addf %216, %10 : vector<8x128xf32>
    %218 = arith.mulf %206, %217 : vector<8x128xf32>
    %219 = arith.addf %215, %218 : vector<8x128xf32>
    %220 = math.tanh %219 : vector<8x128xf32>
    %221 = arith.subf %187, %220 : vector<8x128xf32>
    %222 = arith.mulf %214, %221 : vector<8x128xf32>
    %223 = arith.addf %220, %222 : vector<8x128xf32>
    %224 = arith.truncf %223 : vector<8x128xf32> to vector<8x128xbf16>
    %225 = arith.index_cast %c5_i32 : i32 to index
    %c0_56 = arith.constant 0 : index
    %c0_57 = arith.constant 0 : index
    %226 = vector.load %arg7[%225, %c0_56, %c0_57] : memref<8x8x128xbf16, #tpu.memory_space<vmem>>, vector<1x8x128xbf16>
    %227 = vector.shape_cast %226 : vector<1x8x128xbf16> to vector<8x128xbf16>
    %228 = vector.shape_cast %224 : vector<8x128xbf16> to vector<1x8x128xbf16>
    tpu.vector_store %arg7[%225, %c0_56, %c0_57], %228 {strides = array<i32>} : memref<8x8x128xbf16, #tpu.memory_space<vmem>>, vector<1x8x128xbf16>,
    %c6_i32 = arith.constant 6 : i32
    %229 = arith.index_cast %c6_i32 : i32 to index
    %c0_58 = arith.constant 0 : index
    %c0_59 = arith.constant 0 : index
    %230 = vector.load %arg2[%229, %c0_58, %c0_59] : memref<8x8x32xbf16, #tpu.memory_space<vmem>>, vector<1x8x32xbf16>
    %231 = vector.shape_cast %230 : vector<1x8x32xbf16> to vector<8x32xbf16>
    %cst_60 = arith.constant dense<0.000000e+00> : vector<8x384xf32>
    %232 = tpu.matmul %231, %3, %cst_60 {dimension_numbers = #tpu.dot_dimension_numbers<[1], [0], [0], [1], [0, 0, 1, 1], [], []>} : vector<8x32xbf16>, vector<32x384xbf16>, vector<8x384xf32> -> vector<8x384xf32>
    %233 = arith.addf %232, %7 : vector<8x384xf32>
    %cst_61 = arith.constant dense<0.000000e+00> : vector<8x384xf32>
    %234 = tpu.matmul %224, %4, %cst_61 {dimension_numbers = #tpu.dot_dimension_numbers<[1], [0], [0], [1], [0, 0, 1, 1], [], []>} : vector<8x128xbf16>, vector<128x384xbf16>, vector<8x384xf32> -> vector<8x384xf32>
    %235 = vector.extract_strided_slice %233 {offsets = [0, 0], sizes = [8, 128], strides = [1, 1]} : vector<8x384xf32> to vector<8x128xf32>
    %236 = vector.extract_strided_slice %234 {offsets = [0, 0], sizes = [8, 128], strides = [1, 1]} : vector<8x384xf32> to vector<8x128xf32>
    %237 = arith.addf %235, %236 : vector<8x128xf32>
    %238 = arith.negf %237 : vector<8x128xf32>
    %239 = math.exp %238 : vector<8x128xf32>
    %cst_62 = arith.constant 1.000000e+00 : f32
    %240 = vector.broadcast %cst_62 : f32 to vector<8x128xf32>
    %241 = arith.addf %240, %239 : vector<8x128xf32>
    %242 = arith.divf %240, %241 : vector<8x128xf32>
    %243 = vector.extract_strided_slice %233 {offsets = [0, 128], sizes = [8, 128], strides = [1, 1]} : vector<8x384xf32> to vector<8x128xf32>
    %244 = vector.extract_strided_slice %234 {offsets = [0, 128], sizes = [8, 128], strides = [1, 1]} : vector<8x384xf32> to vector<8x128xf32>
    %245 = arith.addf %243, %244 : vector<8x128xf32>
    %246 = arith.negf %245 : vector<8x128xf32>
    %247 = math.exp %246 : vector<8x128xf32>
    %cst_63 = arith.constant 1.000000e+00 : f32
    %248 = vector.broadcast %cst_63 : f32 to vector<8x128xf32>
    %249 = arith.addf %248, %247 : vector<8x128xf32>
    %250 = arith.divf %248, %249 : vector<8x128xf32>
    %251 = vector.extract_strided_slice %233 {offsets = [0, 256], sizes = [8, 128], strides = [1, 1]} : vector<8x384xf32> to vector<8x128xf32>
    %252 = vector.extract_strided_slice %234 {offsets = [0, 256], sizes = [8, 128], strides = [1, 1]} : vector<8x384xf32> to vector<8x128xf32>
    %253 = arith.addf %252, %10 : vector<8x128xf32>
    %254 = arith.mulf %242, %253 : vector<8x128xf32>
    %255 = arith.addf %251, %254 : vector<8x128xf32>
    %256 = math.tanh %255 : vector<8x128xf32>
    %257 = arith.subf %223, %256 : vector<8x128xf32>
    %258 = arith.mulf %250, %257 : vector<8x128xf32>
    %259 = arith.addf %256, %258 : vector<8x128xf32>
    %260 = arith.truncf %259 : vector<8x128xf32> to vector<8x128xbf16>
    %261 = arith.index_cast %c6_i32 : i32 to index
    %c0_64 = arith.constant 0 : index
    %c0_65 = arith.constant 0 : index
    %262 = vector.load %arg7[%261, %c0_64, %c0_65] : memref<8x8x128xbf16, #tpu.memory_space<vmem>>, vector<1x8x128xbf16>
    %263 = vector.shape_cast %262 : vector<1x8x128xbf16> to vector<8x128xbf16>
    %264 = vector.shape_cast %260 : vector<8x128xbf16> to vector<1x8x128xbf16>
    tpu.vector_store %arg7[%261, %c0_64, %c0_65], %264 {strides = array<i32>} : memref<8x8x128xbf16, #tpu.memory_space<vmem>>, vector<1x8x128xbf16>,
    %c7_i32 = arith.constant 7 : i32
    %265 = arith.index_cast %c7_i32 : i32 to index
    %c0_66 = arith.constant 0 : index
    %c0_67 = arith.constant 0 : index
    %266 = vector.load %arg2[%265, %c0_66, %c0_67] : memref<8x8x32xbf16, #tpu.memory_space<vmem>>, vector<1x8x32xbf16>
    %267 = vector.shape_cast %266 : vector<1x8x32xbf16> to vector<8x32xbf16>
    %cst_68 = arith.constant dense<0.000000e+00> : vector<8x384xf32>
    %268 = tpu.matmul %267, %3, %cst_68 {dimension_numbers = #tpu.dot_dimension_numbers<[1], [0], [0], [1], [0, 0, 1, 1], [], []>} : vector<8x32xbf16>, vector<32x384xbf16>, vector<8x384xf32> -> vector<8x384xf32>
    %269 = arith.addf %268, %7 : vector<8x384xf32>
    %cst_69 = arith.constant dense<0.000000e+00> : vector<8x384xf32>
    %270 = tpu.matmul %260, %4, %cst_69 {dimension_numbers = #tpu.dot_dimension_numbers<[1], [0], [0], [1], [0, 0, 1, 1], [], []>} : vector<8x128xbf16>, vector<128x384xbf16>, vector<8x384xf32> -> vector<8x384xf32>
    %271 = vector.extract_strided_slice %269 {offsets = [0, 0], sizes = [8, 128], strides = [1, 1]} : vector<8x384xf32> to vector<8x128xf32>
    %272 = vector.extract_strided_slice %270 {offsets = [0, 0], sizes = [8, 128], strides = [1, 1]} : vector<8x384xf32> to vector<8x128xf32>
    %273 = arith.addf %271, %272 : vector<8x128xf32>
    %274 = arith.negf %273 : vector<8x128xf32>
    %275 = math.exp %274 : vector<8x128xf32>
    %cst_70 = arith.constant 1.000000e+00 : f32
    %276 = vector.broadcast %cst_70 : f32 to vector<8x128xf32>
    %277 = arith.addf %276, %275 : vector<8x128xf32>
    %278 = arith.divf %276, %277 : vector<8x128xf32>
    %279 = vector.extract_strided_slice %269 {offsets = [0, 128], sizes = [8, 128], strides = [1, 1]} : vector<8x384xf32> to vector<8x128xf32>
    %280 = vector.extract_strided_slice %270 {offsets = [0, 128], sizes = [8, 128], strides = [1, 1]} : vector<8x384xf32> to vector<8x128xf32>
    %281 = arith.addf %279, %280 : vector<8x128xf32>
    %282 = arith.negf %281 : vector<8x128xf32>
    %283 = math.exp %282 : vector<8x128xf32>
    %cst_71 = arith.constant 1.000000e+00 : f32
    %284 = vector.broadcast %cst_71 : f32 to vector<8x128xf32>
    %285 = arith.addf %284, %283 : vector<8x128xf32>
    %286 = arith.divf %284, %285 : vector<8x128xf32>
    %287 = vector.extract_strided_slice %269 {offsets = [0, 256], sizes = [8, 128], strides = [1, 1]} : vector<8x384xf32> to vector<8x128xf32>
    %288 = vector.extract_strided_slice %270 {offsets = [0, 256], sizes = [8, 128], strides = [1, 1]} : vector<8x384xf32> to vector<8x128xf32>
    %289 = arith.addf %288, %10 : vector<8x128xf32>
    %290 = arith.mulf %278, %289 : vector<8x128xf32>
    %291 = arith.addf %287, %290 : vector<8x128xf32>
    %292 = math.tanh %291 : vector<8x128xf32>
    %293 = arith.subf %259, %292 : vector<8x128xf32>
    %294 = arith.mulf %286, %293 : vector<8x128xf32>
    %295 = arith.addf %292, %294 : vector<8x128xf32>
    %296 = arith.truncf %295 : vector<8x128xf32> to vector<8x128xbf16>
    %297 = arith.index_cast %c7_i32 : i32 to index
    %c0_72 = arith.constant 0 : index
    %c0_73 = arith.constant 0 : index
    %298 = vector.load %arg7[%297, %c0_72, %c0_73] : memref<8x8x128xbf16, #tpu.memory_space<vmem>>, vector<1x8x128xbf16>
    %299 = vector.shape_cast %298 : vector<1x8x128xbf16> to vector<8x128xbf16>
    %300 = vector.shape_cast %296 : vector<8x128xbf16> to vector<1x8x128xbf16>
    tpu.vector_store %arg7[%297, %c0_72, %c0_73], %300 {strides = array<i32>} : memref<8x8x128xbf16, #tpu.memory_space<vmem>>, vector<1x8x128xbf16>,
    %c8_i32 = arith.constant 8 : i32
    %c0_74 = arith.constant 0 : index
    %c0_75 = arith.constant 0 : index
    %301 = vector.load %arg8[%c0_74, %c0_75] : memref<8x128xf32, #tpu.memory_space<vmem>>, vector<8x128xf32>
    tpu.vector_store %arg8[%c0_74, %c0_75], %295 {strides = array<i32>} : memref<8x128xf32, #tpu.memory_space<vmem>>, vector<8x128xf32>,
    return
  }
  func.func @transform_0(%arg0: i32, %arg1: i32) -> (i32, i32, i32) {
    %c0_i32 = arith.constant 0 : i32
    %c0_i32_0 = arith.constant 0 : i32
    return %arg1, %arg0, %c0_i32 : i32, i32, i32
  }
  func.func @transform_1(%arg0: i32, %arg1: i32) -> (i32, i32) {
    %c0_i32 = arith.constant 0 : i32
    %c0_i32_0 = arith.constant 0 : i32
    %c0_i32_1 = arith.constant 0 : i32
    return %c0_i32, %c0_i32_0 : i32, i32
  }
  func.func @transform_2(%arg0: i32, %arg1: i32) -> (i32, i32) {
    %c0_i32 = arith.constant 0 : i32
    %c0_i32_0 = arith.constant 0 : i32
    %c0_i32_1 = arith.constant 0 : i32
    return %c0_i32, %c0_i32_0 : i32, i32
  }
  func.func @transform_3(%arg0: i32, %arg1: i32) -> (i32, i32) {
    %c0_i32 = arith.constant 0 : i32
    %c0_i32_0 = arith.constant 0 : i32
    %c0_i32_1 = arith.constant 0 : i32
    return %c0_i32, %c0_i32_0 : i32, i32
  }
  func.func @transform_4(%arg0: i32, %arg1: i32) -> (i32, i32) {
    %c0_i32 = arith.constant 0 : i32
    %c0_i32_0 = arith.constant 0 : i32
    %c0_i32_1 = arith.constant 0 : i32
    return %c0_i32, %c0_i32_0 : i32, i32
  }
  func.func @transform_5(%arg0: i32, %arg1: i32) -> (i32, i32, i32) {
    %c0_i32 = arith.constant 0 : i32
    %c0_i32_0 = arith.constant 0 : i32
    return %arg1, %arg0, %c0_i32 : i32, i32, i32
  }
}

module attributes {stable_mosaic.version = 11 : i64} {
  func.func @_linear_kernel(%arg0: i32, %arg1: i32, %arg2: memref<16x128xbf16, #tpu.memory_space<vmem>>, %arg3: memref<128x128xbf16, #tpu.memory_space<vmem>>, %arg4: memref<1x128xf32, #tpu.memory_space<vmem>>, %arg5: memref<16x128xf32, #tpu.memory_space<vmem>>) attributes {dimension_semantics = [#tpu.dimension_semantics<parallel>, #tpu.dimension_semantics<parallel>], iteration_bounds = array<i64: 1, 1>, scalar_prefetch = 0 : i64, scratch_operands = 0 : i64, tpu.core_type = #tpu.core_type<tc>, window_params = [{transform_indices = @transform_0, window_bounds = array<i64: 16, 128>}, {transform_indices = @transform_1, window_bounds = array<i64: 128, 128>}, {transform_indices = @transform_2, window_bounds = array<i64: 1, 128>}, {transform_indices = @transform_3, window_bounds = array<i64: 16, 128>}]} {
    %c0 = arith.constant 0 : index
    %c0_0 = arith.constant 0 : index
    %0 = vector.load %arg2[%c0, %c0_0] : memref<16x128xbf16, #tpu.memory_space<vmem>>, vector<16x128xbf16>
    %c0_1 = arith.constant 0 : index
    %c0_2 = arith.constant 0 : index
    %1 = vector.load %arg3[%c0_1, %c0_2] : memref<128x128xbf16, #tpu.memory_space<vmem>>, vector<128x128xbf16>
    %cst = arith.constant dense<0.000000e+00> : vector<16x128xf32>
    %2 = tpu.matmul %0, %1, %cst {dimension_numbers = #tpu.dot_dimension_numbers<[1], [0], [0], [1], [0, 0, 1, 1], [], []>} : vector<16x128xbf16>, vector<128x128xbf16>, vector<16x128xf32> -> vector<16x128xf32>
    %c0_3 = arith.constant 0 : index
    %c0_4 = arith.constant 0 : index
    %3 = vector.load %arg4[%c0_3, %c0_4] : memref<1x128xf32, #tpu.memory_space<vmem>>, vector<1x128xf32>
    %4 = vector.broadcast %3 : vector<1x128xf32> to vector<16x128xf32>
    %5 = arith.addf %2, %4 : vector<16x128xf32>
    %c0_5 = arith.constant 0 : index
    %c0_6 = arith.constant 0 : index
    %6 = vector.load %arg5[%c0_5, %c0_6] : memref<16x128xf32, #tpu.memory_space<vmem>>, vector<16x128xf32>
    tpu.vector_store %arg5[%c0_5, %c0_6], %5 {strides = array<i32>} : memref<16x128xf32, #tpu.memory_space<vmem>>, vector<16x128xf32>,
    return
  }
  func.func @transform_0(%arg0: i32, %arg1: i32) -> (i32, i32) {
    %c0_i32 = arith.constant 0 : i32
    %c0_i32_0 = arith.constant 0 : i32
    return %arg0, %c0_i32 : i32, i32
  }
  func.func @transform_1(%arg0: i32, %arg1: i32) -> (i32, i32) {
    %c0_i32 = arith.constant 0 : i32
    %c0_i32_0 = arith.constant 0 : i32
    return %c0_i32, %arg1 : i32, i32
  }
  func.func @transform_2(%arg0: i32, %arg1: i32) -> (i32, i32) {
    %c0_i32 = arith.constant 0 : i32
    %c0_i32_0 = arith.constant 0 : i32
    return %c0_i32, %arg1 : i32, i32
  }
  func.func @transform_3(%arg0: i32, %arg1: i32) -> (i32, i32) {
    %c0_i32 = arith.constant 0 : i32
    return %arg0, %arg1 : i32, i32
  }
}

</mosaic_0001>

<llo_original>
// kernel: gru_item_event_forward.3
$region0: #{gru_item_event_forward.3}
  #allocation0 [shape = 'u32[]', space=smem, size = 0x4, offset = 0x4, fixed_abs, tag = 'smem constant byte address 0x4 - core index']
  #allocation1 [shape = 'u32[144,128]{1,0:T(1,128)}', space=vmem, size = 0x12000, scoped, tag = 'internal scratch']
  %s0 = inlined_call_operand.hbm [shape: bf16[16,128], index: 0, kind: input, shape index: {}]
  %s1 = inlined_call_operand.hbm [shape: bf16[128,128], index: 1, kind: input, shape index: {}]
  %s2 = inlined_call_operand.hbm [shape: f32[1,128], index: 2, kind: input, shape index: {}]
  %s3 = inlined_call_operand.hbm [shape: f32[16,128], index: 3, kind: output, shape index: {}]
  %s4 = sld [smem:[#allocation0]]
  $region34: #{gru_item_event_forward.3} parent=0
    _
  %s6 = ssub.s32 1, %s4
  %s7 = scalar_select 0, %s6, %s4
  $region1: #{gru_item_event_forward.3} parent=0
    #allocation2 [shape = 'u8[4096]{0}', space=vmem, size = 0x1000, scoped, tag = 'input window, operand 0, single buffered']
    #allocation3 [shape = 's32[1]{0}', space=sflag, size = 0x4, scoped, tag = 'scoped memory for gru_item_event_forward.3']
    #allocation4 [shape = 's32[1]{0}', space=sflag, size = 0x4, scoped, tag = 'scoped memory for gru_item_event_forward.3']
    #allocation5 [shape = 'u8[32768]{0}', space=vmem, size = 0x8000, scoped, tag = 'input window, operand 1, single buffered']
    #allocation6 [shape = 's32[1]{0}', space=sflag, size = 0x4, scoped, tag = 'scoped memory for gru_item_event_forward.3']
    #allocation7 [shape = 'u8[512]{0}', space=vmem, size = 0x400, scoped, tag = 'input window, operand 2, single buffered']
    #allocation8 [shape = 'u8[8192]{0}', space=vmem, size = 0x2000, scoped, tag = 'output window, operand 0, single buffered']
    %8 = vsyncpa [#allocation3], 0
    %9 = vsyncpa [#allocation6], 0
    %10 = vsyncpa [#allocation4], 0
    // Predicated region
    $region2: #{gru_item_event_forward.3} parent=1 // pred_check
      _
    $region3: #{gru_item_event_forward.3} parent=1 // pred_check_branch
      %12 = sbr.rel (0) target = $region5
    $region4: #{gru_item_event_forward.3} parent=1 // pred_region
      %s14 = ssub.s32 128, 128
      %15 = vsyncadd [#allocation3], %s14
      %s16 = sshll.u32 [#allocation2], 4
      %s17 = int_to_ptr.vmem [resolvable:$true] %s16
      %22 = dma.hbm_to_vmem [thread:$0]  %s0, 128, %s17, [#allocation3], 64, 64, 4
    $region5: #{gru_item_event_forward.3} parent=1 // pred_fallthru
      _
    // Predicated region
    $region6: #{gru_item_event_forward.3} parent=1 // pred_check
      _
    $region7: #{gru_item_event_forward.3} parent=1 // pred_check_branch
      %24 = sbr.rel (0) target = $region9
    $region8: #{gru_item_event_forward.3} parent=1 // pred_region
      %s26 = ssub.s32 1024, 1024
      %27 = vsyncadd [#allocation6], %s26
      %s28 = sshll.u32 [#allocation5], 4
      %s29 = int_to_ptr.vmem [resolvable:$true] %s28
      %34 = dma.hbm_to_vmem [thread:$0]  %s1, 1024, %s29, [#allocation6], 64, 64, 4
    $region9: #{gru_item_event_forward.3} parent=1 // pred_fallthru
      _
    // Predicated region
    $region10: #{gru_item_event_forward.3} parent=1 // pred_check
      _
    $region11: #{gru_item_event_forward.3} parent=1 // pred_check_branch
      %36 = sbr.rel (0) target = $region13
    $region12: #{gru_item_event_forward.3} parent=1 // pred_region
      %s38 = ssub.s32 16, 16
      %39 = vsyncadd [#allocation6], %s38
      %s41 = sshll.u32 [#allocation7], 4
      %s42 = int_to_ptr.vmem [resolvable:$true] %s41
      %44 = dma.hbm_to_vmem [thread:$0]  %s2, 16, %s42, [#allocation6]
    $region13: #{gru_item_event_forward.3} parent=1 // pred_fallthru
      _
    // Predicated region
    $region14: #{gru_item_event_forward.3} parent=1 // pred_check
      _
    $region15: #{gru_item_event_forward.3} parent=1 // pred_check_branch
      %46 = sbr.rel (0) target = $region17
    $region16: #{gru_item_event_forward.3} parent=1 // pred_region
      %47 = dma.done [#allocation3], 128
    $region17: #{gru_item_event_forward.3} parent=1 // pred_fallthru
      _
    // Predicated region
    $region18: #{gru_item_event_forward.3} parent=1 // pred_check
      _
    $region19: #{gru_item_event_forward.3} parent=1 // pred_check_branch
      %49 = sbr.rel (0) target = $region21
    $region20: #{gru_item_event_forward.3} parent=1 // pred_region
      %50 = dma.done [#allocation6], 1024
    $region21: #{gru_item_event_forward.3} parent=1 // pred_fallthru
      _
    // Predicated region
    $region22: #{gru_item_event_forward.3} parent=1 // pred_check
      _
    $region23: #{gru_item_event_forward.3} parent=1 // pred_check_branch
      %52 = sbr.rel (0) target = $region25
    $region24: #{gru_item_event_forward.3} parent=1 // pred_region
      %53 = dma.done [#allocation6], 16
    $region25: #{gru_item_event_forward.3} parent=1 // pred_fallthru
      _
    %v55 = vld [vmem:[#allocation2] sm:$0xf]
    %v56 = vld [vmem:[#allocation2 + $0x4] sm:$0xf]
    %v57 = vld [vmem:[#allocation5] sm:$0xf]
    %v58 = vld [vmem:[#allocation5 + $0x4] sm:$0xf]
    %v59 = vld [vmem:[#allocation5 + $0x8] sm:$0xf]
    %v60 = vld [vmem:[#allocation5 + $0xc] sm:$0xf]
    %v61 = vld [vmem:[#allocation5 + $0x10] sm:$0xf]
    %v62 = vld [vmem:[#allocation5 + $0x14] sm:$0xf]
    %v63 = vld [vmem:[#allocation5 + $0x18] sm:$0xf]
    %v64 = vld [vmem:[#allocation5 + $0x1c] sm:$0xf]
    %v65 = vld [vmem:[#allocation5 + $0x20] sm:$0xf]
    %v66 = vld [vmem:[#allocation5 + $0x24] sm:$0xf]
    %v67 = vld [vmem:[#allocation5 + $0x28] sm:$0xf]
    %v68 = vld [vmem:[#allocation5 + $0x2c] sm:$0xf]
    %v69 = vld [vmem:[#allocation5 + $0x30] sm:$0xf]
    %v70 = vld [vmem:[#allocation5 + $0x34] sm:$0xf]
    %v71 = vld [vmem:[#allocation5 + $0x38] sm:$0xf]
    %v72 = vld [vmem:[#allocation5 + $0x3c] sm:$0xf]
    %v73 = vld [vmem:[#allocation7] sm:$0x1]
    %v75 = vlaneseq
    %v76 = vshrl.u32 %v75, 7
    %v77 = vsub.s32 0, %v76
    %v78 = vrot.slane %v73, %v77
    %v82 = vunpack.c.l.b16 %v55
    %v83 = vunpack.c.l.b16 %v56
    %v84 = vpack.c.b16 %v83, %v82
    %v102 = vunpack.c.l.b16 %v57
    %v103 = vunpack.c.l.b16 %v58
    %v104 = vunpack.c.l.b16 %v59
    %v105 = vunpack.c.l.b16 %v60
    %v106 = vunpack.c.l.b16 %v61
    %v107 = vunpack.c.l.b16 %v62
    %v108 = vunpack.c.l.b16 %v63
    %v109 = vunpack.c.l.b16 %v64
    %v110 = vunpack.c.l.b16 %v65
    %v111 = vunpack.c.l.b16 %v66
    %v112 = vunpack.c.l.b16 %v67
    %v113 = vunpack.c.l.b16 %v68
    %v114 = vunpack.c.l.b16 %v69
    %v115 = vunpack.c.l.b16 %v70
    %v116 = vunpack.c.l.b16 %v71
    %v117 = vunpack.c.l.b16 %v72
    %v118 = vpack.c.b16 %v103, %v102
    %v119 = vpack.c.b16 %v105, %v104
    %v120 = vpack.c.b16 %v107, %v106
    %v121 = vpack.c.b16 %v109, %v108
    %v122 = vpack.c.b16 %v111, %v110
    %v123 = vpack.c.b16 %v113, %v112
    %v124 = vpack.c.b16 %v115, %v114
    %v125 = vpack.c.b16 %v117, %v116
    %134 = vmatprep.subr.bf16.mxu0 0
    %135 = vmatpush1.bf16.msra.mxu0 %v118
    %136 = vmatprep.subr.bf16.mxu0 0
    %137 = vmatpush1.bf16.msra.mxu0 %v119
    %138 = vmatprep.subr.bf16.mxu0 0
    %139 = vmatpush1.bf16.msra.mxu0 %v120
    %140 = vmatprep.subr.bf16.mxu0 0
    %141 = vmatpush1.bf16.msra.mxu0 %v121
    %142 = vmatprep.subr.bf16.mxu0 0
    %143 = vmatpush1.bf16.msra.mxu0 %v122
    %144 = vmatprep.subr.bf16.mxu0 0
    %145 = vmatpush1.bf16.msra.mxu0 %v123
    %146 = vmatprep.subr.bf16.mxu0 0
    %147 = vmatpush1.bf16.msra.mxu0 %v124
    %148 = vmatprep.subr.bf16.mxu0 0
    %149 = vmatpush1.bf16.msra.mxu0 %v125
    %150 = vmatprep.subr.bf16.mxu0 0
    %151 = vmatpush1.bf16.msra.mxu0 0
    %152 = vmatprep.subr.bf16.mxu0 0
    %153 = vmatpush1.bf16.msra.mxu0 0
    %154 = vmatprep.subr.bf16.mxu0 0
    %155 = vmatpush1.bf16.msra.mxu0 0
    %156 = vmatprep.subr.bf16.mxu0 0
    %157 = vmatpush1.bf16.msra.mxu0 0
    %158 = vmatprep.subr.bf16.mxu0 0
    %159 = vmatpush1.bf16.msra.mxu0 0
    %160 = vmatprep.subr.bf16.mxu0 0
    %161 = vmatpush1.bf16.msra.mxu0 0
    %162 = vmatprep.subr.bf16.mxu0 0
    %163 = vmatpush1.bf16.msra.mxu0 0
    %164 = vmatprep.subr.bf16.mxu0 0
    %165 = vmatpush1.bf16.msra.mxu0 0
    %166 = vmatprep.mubr.bf16.mxu0 0
    %167 = vmatmul.mubr.bf16.gmra.mrb[0].mxu0 %v84
    %v168 = vpop.f32.mrb[0].mxu0
    %v169 = vadd.f32 %v78, %v168
    %v170 = vpop.f32.mrb[0].mxu0
    %v171 = vpop.f32.mrb[0].mxu0
    %v172 = vadd.f32 %v78, %v171
    %v173 = vpop.f32.mrb[0].mxu0
    %174 = vdwg.mxu0
    %175 = vst [vmem:[#allocation8] sm:$0xff] %v169
    %176 = vst [vmem:[#allocation8 + $0x8] sm:$0xff] %v172
    // Predicated region
    $region26: #{gru_item_event_forward.3} parent=1 // pred_check
      _
    $region27: #{gru_item_event_forward.3} parent=1 // pred_check_branch
      %178 = sbr.rel (0) target = $region29
    $region28: #{gru_item_event_forward.3} parent=1 // pred_region
      %s180 = ssub.s32 256, 256
      %181 = vsyncadd [#allocation4], %s180
      %s182 = sshll.u32 [#allocation8], 4
      %s183 = int_to_ptr.vmem [resolvable:$true] %s182
      %188 = dma.vmem_to_hbm [thread:$0]  %s183, 256, %s3, [#allocation4], 128, 128, 8
    $region29: #{gru_item_event_forward.3} parent=1 // pred_fallthru
      _
    // Predicated region
    $region30: #{gru_item_event_forward.3} parent=1 // pred_check
      _
    $region31: #{gru_item_event_forward.3} parent=1 // pred_check_branch
      %190 = sbr.rel (0) target = $region33
    $region32: #{gru_item_event_forward.3} parent=1 // pred_region
      %191 = dma.done [#allocation4], 256
    $region33: #{gru_item_event_forward.3} parent=1 // pred_fallthru
      _
    %192 = vsyncpa [#allocation3], 1
    %193 = vsyncpa [#allocation6], 1
    %194 = vsyncpa [#allocation4], 1

// kernel: gru_item_event_forward.2
$region0: #{gru_item_event_forward.2}
  #allocation0 [shape = 'u32[]', space=smem, size = 0x4, offset = 0x4, fixed_abs, tag = 'smem constant byte address 0x4 - core index']
  #allocation1 [shape = 'u32[144,128]{1,0:T(1,128)}', space=vmem, size = 0x12000, scoped, tag = 'internal scratch']
  #allocation2 [shape = 'f32[8,128]{1,0:T(8,128)}', space=vmem, size = 0x1000, scoped, tag = 'scratch operand']
  %s0 = inlined_call_operand.hbm [shape: bf16[8,8,32], index: 0, kind: input, shape index: {}]
  %s1 = inlined_call_operand.hbm [shape: bf16[32,384], index: 1, kind: input, shape index: {}]
  %s2 = inlined_call_operand.hbm [shape: f32[1,384], index: 2, kind: input, shape index: {}]
  %s3 = inlined_call_operand.hbm [shape: bf16[128,384], index: 3, kind: input, shape index: {}]
  %s4 = inlined_call_operand.hbm [shape: f32[1,128], index: 4, kind: input, shape index: {}]
  %s5 = inlined_call_operand.hbm [shape: bf16[8,8,128], index: 5, kind: output, shape index: {}]
  %s6 = sld [smem:[#allocation0]]
  $region54: #{gru_item_event_forward.2} parent=0
    _
  %s8 = ssub.s32 1, %s6
  %s9 = scalar_select 0, %s8, %s6
  $region1: #{gru_item_event_forward.2} parent=0
    #allocation3 [shape = 'u8[16384]{0}', space=vmem, size = 0x4000, scoped, tag = 'input window, operand 0, single buffered']
    #allocation4 [shape = 's32[1]{0}', space=sflag, size = 0x4, scoped, tag = 'scoped memory for gru_item_event_forward.2']
    #allocation5 [shape = 's32[1]{0}', space=sflag, size = 0x4, scoped, tag = 'scoped memory for gru_item_event_forward.2']
    #allocation6 [shape = 'u8[24576]{0}', space=vmem, size = 0x6000, scoped, tag = 'input window, operand 1, single buffered']
    #allocation7 [shape = 's32[1]{0}', space=sflag, size = 0x4, scoped, tag = 'scoped memory for gru_item_event_forward.2']
    #allocation8 [shape = 'u8[1536]{0}', space=vmem, size = 0x800, scoped, tag = 'input window, operand 2, single buffered']
    #allocation9 [shape = 'u8[98304]{0}', space=vmem, size = 0x18000, scoped, tag = 'input window, operand 3, single buffered']
    #allocation10 [shape = 's32[1]{0}', space=sflag, size = 0x4, scoped, tag = 'scoped memory for gru_item_event_forward.2']
    #allocation11 [shape = 'u8[512]{0}', space=vmem, size = 0x400, scoped, tag = 'input window, operand 4, single buffered']
    #allocation12 [shape = 'u8[16384]{0}', space=vmem, size = 0x4000, scoped, tag = 'output window, operand 0, single buffered']
    %10 = vsyncpa [#allocation4], 0
    %11 = vsyncpa [#allocation7], 0
    %12 = vsyncpa [#allocation10], 0
    %13 = vsyncpa [#allocation5], 0
    // Predicated region
    $region2: #{gru_item_event_forward.2} parent=1 // pred_check
      _
    $region3: #{gru_item_event_forward.2} parent=1 // pred_check_branch
      %15 = sbr.rel (0) target = $region5
    $region4: #{gru_item_event_forward.2} parent=1 // pred_region
      %s17 = ssub.s32 512, 512
      %18 = vsyncadd [#allocation4], %s17
      %s19 = sshll.u32 [#allocation3], 4
      %s20 = int_to_ptr.vmem [resolvable:$true] %s19
      %25 = dma.hbm_to_vmem [thread:$0]  %s0, 512, %s20, [#allocation4], 64, 64, 4
    $region5: #{gru_item_event_forward.2} parent=1 // pred_fallthru
      _
    // Predicated region
    $region6: #{gru_item_event_forward.2} parent=1 // pred_check
      _
    $region7: #{gru_item_event_forward.2} parent=1 // pred_check_branch
      %27 = sbr.rel (0) target = $region9
    $region8: #{gru_item_event_forward.2} parent=1 // pred_region
      %s29 = ssub.s32 768, 768
      %30 = vsyncadd [#allocation7], %s29
      %s31 = sshll.u32 [#allocation6], 4
      %s32 = int_to_ptr.vmem [resolvable:$true] %s31
      %37 = dma.hbm_to_vmem [thread:$0]  %s1, 768, %s32, [#allocation7], 192, 192, 12
    $region9: #{gru_item_event_forward.2} parent=1 // pred_fallthru
      _
    // Predicated region
    $region10: #{gru_item_event_forward.2} parent=1 // pred_check
      _
    $region11: #{gru_item_event_forward.2} parent=1 // pred_check_branch
      %39 = sbr.rel (0) target = $region13
    $region12: #{gru_item_event_forward.2} parent=1 // pred_region
      %s41 = ssub.s32 48, 48
      %42 = vsyncadd [#allocation7], %s41
      %s44 = sshll.u32 [#allocation8], 4
      %s45 = int_to_ptr.vmem [resolvable:$true] %s44
      %47 = dma.hbm_to_vmem [thread:$0]  %s2, 48, %s45, [#allocation7]
    $region13: #{gru_item_event_forward.2} parent=1 // pred_fallthru
      _
    // Predicated region
    $region14: #{gru_item_event_forward.2} parent=1 // pred_check
      _
    $region15: #{gru_item_event_forward.2} parent=1 // pred_check_branch
      %49 = sbr.rel (0) target = $region17
    $region16: #{gru_item_event_forward.2} parent=1 // pred_region
      %s51 = ssub.s32 3072, 3072
      %52 = vsyncadd [#allocation10], %s51
      %s53 = sshll.u32 [#allocation9], 4
      %s54 = int_to_ptr.vmem [resolvable:$true] %s53
      %59 = dma.hbm_to_vmem [thread:$0]  %s3, 3072, %s54, [#allocation10], 192, 192, 12
    $region17: #{gru_item_event_forward.2} parent=1 // pred_fallthru
      _
    // Predicated region
    $region18: #{gru_item_event_forward.2} parent=1 // pred_check
      _
    $region19: #{gru_item_event_forward.2} parent=1 // pred_check_branch
      %61 = sbr.rel (0) target = $region21
    $region20: #{gru_item_event_forward.2} parent=1 // pred_region
      %s63 = ssub.s32 16, 16
      %64 = vsyncadd [#allocation10], %s63
      %s66 = sshll.u32 [#allocation11], 4
      %s67 = int_to_ptr.vmem [resolvable:$true] %s66
      %69 = dma.hbm_to_vmem [thread:$0]  %s4, 16, %s67, [#allocation10]
    $region21: #{gru_item_event_forward.2} parent=1 // pred_fallthru
      _
    // Predicated region
    $region22: #{gru_item_event_forward.2} parent=1 // pred_check
      _
    $region23: #{gru_item_event_forward.2} parent=1 // pred_check_branch
      %71 = sbr.rel (0) target = $region25
    $region24: #{gru_item_event_forward.2} parent=1 // pred_region
      %72 = dma.done [#allocation4], 512
    $region25: #{gru_item_event_forward.2} parent=1 // pred_fallthru
      _
    // Predicated region
    $region26: #{gru_item_event_forward.2} parent=1 // pred_check
      _
    $region27: #{gru_item_event_forward.2} parent=1 // pred_check_branch
      %74 = sbr.rel (0) target = $region29
    $region28: #{gru_item_event_forward.2} parent=1 // pred_region
      %75 = dma.done [#allocation7], 768
    $region29: #{gru_item_event_forward.2} parent=1 // pred_fallthru
      _
    // Predicated region
    $region30: #{gru_item_event_forward.2} parent=1 // pred_check
      _
    $region31: #{gru_item_event_forward.2} parent=1 // pred_check_branch
      %77 = sbr.rel (0) target = $region33
    $region32: #{gru_item_event_forward.2} parent=1 // pred_region
      %78 = dma.done [#allocation7], 48
    $region33: #{gru_item_event_forward.2} parent=1 // pred_fallthru
      _
    // Predicated region
    $region34: #{gru_item_event_forward.2} parent=1 // pred_check
      _
    $region35: #{gru_item_event_forward.2} parent=1 // pred_check_branch
      %80 = sbr.rel (0) target = $region37
    $region36: #{gru_item_event_forward.2} parent=1 // pred_region
      %81 = dma.done [#allocation10], 3072
    $region37: #{gru_item_event_forward.2} parent=1 // pred_fallthru
      _
    // Predicated region
    $region38: #{gru_item_event_forward.2} parent=1 // pred_check
      _
    $region39: #{gru_item_event_forward.2} parent=1 // pred_check_branch
      %83 = sbr.rel (0) target = $region41
    $region40: #{gru_item_event_forward.2} parent=1 // pred_region
      %84 = dma.done [#allocation10], 16
    $region41: #{gru_item_event_forward.2} parent=1 // pred_fallthru
      _
    %p86 = scmp.eq.s32.totalorder 0, 0
    // Predicated region
    $region42: #{gru_item_event_forward.2} parent=1 // pred_check
      %p87 = pneg %p86
    $region43: #{gru_item_event_forward.2} parent=1 // pred_check_branch
      %89 = sbr.rel (%p87) target = $region45
    $region44: #{gru_item_event_forward.2} parent=1 // pred_region
      %90 = vst [vmem:[#allocation2] sm:$0xff] 0.0
    $region45: #{gru_item_event_forward.2} parent=1 // pred_fallthru
      _
    %v91 = vld [vmem:[#allocation6] sm:$0xff]
    %v92 = vld [vmem:[#allocation6 + $0x8] sm:$0xf]
    %v93 = vld [vmem:[#allocation6 + $0xc] sm:$0xff]
    %v94 = vld [vmem:[#allocation6 + $0x14] sm:$0xf]
    %v95 = vld [vmem:[#allocation6 + $0x18] sm:$0xff]
    %v96 = vld [vmem:[#allocation6 + $0x20] sm:$0xf]
    %v97 = vld [vmem:[#allocation6 + $0x24] sm:$0xff]
    %v98 = vld [vmem:[#allocation6 + $0x2c] sm:$0xf]
    %v99 = vld [vmem:[#allocation9] sm:$0xff]
    %v100 = vld [vmem:[#allocation9 + $0x8] sm:$0xf]
    %v101 = vld [vmem:[#allocation9 + $0xc] sm:$0xff]
    %v102 = vld [vmem:[#allocation9 + $0x14] sm:$0xf]
    %v103 = vld [vmem:[#allocation9 + $0x18] sm:$0xff]
    %v104 = vld [vmem:[#allocation9 + $0x20] sm:$0xf]
    %v105 = vld [vmem:[#allocation9 + $0x24] sm:$0xff]
    %v106 = vld [vmem:[#allocation9 + $0x2c] sm:$0xf]
    %v107 = vld [vmem:[#allocation9 + $0x30] sm:$0xff]
    %v108 = vld [vmem:[#allocation9 + $0x38] sm:$0xf]
    %v109 = vld [vmem:[#allocation9 + $0x3c] sm:$0xff]
    %v110 = vld [vmem:[#allocation9 + $0x44] sm:$0xf]
    %v111 = vld [vmem:[#allocation9 + $0x48] sm:$0xff]
    %v112 = vld [vmem:[#allocation9 + $0x50] sm:$0xf]
    %v113 = vld [vmem:[#allocation9 + $0x54] sm:$0xff]
    %v114 = vld [vmem:[#allocation9 + $0x5c] sm:$0xf]
    %v115 = vld [vmem:[#allocation9 + $0x60] sm:$0xff]
    %v116 = vld [vmem:[#allocation9 + $0x68] sm:$0xf]
    %v117 = vld [vmem:[#allocation9 + $0x6c] sm:$0xff]
    %v118 = vld [vmem:[#allocation9 + $0x74] sm:$0xf]
    %v119 = vld [vmem:[#allocation9 + $0x78] sm:$0xff]
    %v120 = vld [vmem:[#allocation9 + $0x80] sm:$0xf]
    %v121 = vld [vmem:[#allocation9 + $0x84] sm:$0xff]
    %v122 = vld [vmem:[#allocation9 + $0x8c] sm:$0xf]
    %v123 = vld [vmem:[#allocation9 + $0x90] sm:$0xff]
    %v124 = vld [vmem:[#allocation9 + $0x98] sm:$0xf]
    %v125 = vld [vmem:[#allocation9 + $0x9c] sm:$0xff]
    %v126 = vld [vmem:[#allocation9 + $0xa4] sm:$0xf]
    %v127 = vld [vmem:[#allocation9 + $0xa8] sm:$0xff]
    %v128 = vld [vmem:[#allocation9 + $0xb0] sm:$0xf]
    %v129 = vld [vmem:[#allocation9 + $0xb4] sm:$0xff]
    %v130 = vld [vmem:[#allocation9 + $0xbc] sm:$0xf]
    %v131 = vld [vmem:[#allocation8] sm:$0x7]
    %v133 = vlaneseq
    %v134 = vshrl.u32 %v133, 7
    %v135 = vsub.s32 0, %v134
    %v136 = vrot.slane %v131, %v135
    %v137 = vlaneseq
    %v138 = vshrl.u32 %v137, 7
    %v139 = vsub.s32 1, %v138
    %v140 = vrot.slane %v131, %v139
    %v141 = vlaneseq
    %v142 = vshrl.u32 %v141, 7
    %v143 = vsub.s32 2, %v142
    %v144 = vrot.slane %v131, %v143
    %v148 = vld [vmem:[#allocation11] sm:$0x1]
    %v150 = vlaneseq
    %v151 = vshrl.u32 %v150, 7
    %v152 = vsub.s32 0, %v151
    %v153 = vrot.slane %v148, %v152
    %v155 = vld [vmem:[#allocation2] sm:$0xff]
    %v156 = vpack.c.bf16 %v155, %v155
    %v157 = vld [vmem:[#allocation3] sm:$0xf]
    %v166 = vunpack.c.l.b16 %v91
    %v167 = vunpack.c.h.b16 %v91
    %v168 = vunpack.c.l.b16 %v92
    %v169 = vunpack.c.l.b16 %v93
    %v170 = vunpack.c.h.b16 %v93
    %v171 = vunpack.c.l.b16 %v94
    %v172 = vunpack.c.l.b16 %v95
    %v173 = vunpack.c.h.b16 %v95
    %v174 = vunpack.c.l.b16 %v96
    %v175 = vunpack.c.l.b16 %v97
    %v176 = vunpack.c.h.b16 %v97
    %v177 = vunpack.c.l.b16 %v98
    %v178 = vpack.c.b16 %v169, %v166
    %v179 = vpack.c.b16 %v170, %v167
    %v180 = vpack.c.b16 %v171, %v168
    %v181 = vpack.c.b16 %v175, %v172
    %v182 = vpack.c.b16 %v176, %v173
    %v183 = vpack.c.b16 %v177, %v174
    %vm190 = vcmask 261120
    %v192 = vsel %vm190, %v157, 0
    %194 = vmatprep.subr.bf16.mxu0 %v179
    %195 = vmatpush1.bf16.msra.mxu0 %v178
    %196 = vmatprep.subr.bf16.mxu0 %v182
    %197 = vmatpush1.bf16.msra.mxu0 %v181
    %198 = vmatprep.subr.bf16.mxu0 0
    %199 = vmatpush1.bf16.msra.mxu0 0
    %200 = vmatprep.subr.bf16.mxu0 0
    %201 = vmatpush1.bf16.msra.mxu0 0
    %202 = vmatprep.subr.bf16.mxu0 0
    %203 = vmatpush1.bf16.msra.mxu0 0
    %204 = vmatprep.subr.bf16.mxu0 0
    %205 = vmatpush1.bf16.msra.mxu0 0
    %206 = vmatprep.subr.bf16.mxu0 0
    %207 = vmatpush1.bf16.msra.mxu0 0
    %208 = vmatprep.subr.bf16.mxu0 0
    %209 = vmatpush1.bf16.msra.mxu0 0
    %210 = vmatprep.subr.bf16.mxu0 0
    %211 = vmatpush1.bf16.msra.mxu0 0
    %212 = vmatprep.subr.bf16.mxu0 0
    %213 = vmatpush1.bf16.msra.mxu0 0
    %214 = vmatprep.subr.bf16.mxu0 0
    %215 = vmatpush1.bf16.msra.mxu0 0
    %216 = vmatprep.subr.bf16.mxu0 0
    %217 = vmatpush1.bf16.msra.mxu0 0
    %218 = vmatprep.subr.bf16.mxu0 0
    %219 = vmatpush1.bf16.msra.mxu0 0
    %220 = vmatprep.subr.bf16.mxu0 0
    %221 = vmatpush1.bf16.msra.mxu0 0
    %222 = vmatprep.subr.bf16.mxu0 0
    %223 = vmatpush1.bf16.msra.mxu0 0
    %224 = vmatprep.subr.bf16.mxu0 0
    %225 = vmatpush1.bf16.msra.mxu0 0
    %226 = vmatprep.mubr.bf16.mxu0 0
    %227 = vmatmul.mubr.bf16.gmra.mrb[0].mxu0 %v192
    %v228 = vpop.f32.mrb[0].mxu0
    %v229 = vadd.f32 %v136, %v228
    %v230 = vpop.f32.mrb[0].mxu0
    %v231 = vadd.f32 %v140, %v230
    %v232 = vpop.f32.mrb[0].mxu0
    %v233 = vpop.f32.mrb[0].mxu0
    %234 = vdwg.mxu0
    %235 = vmatprep.subr.bf16.mxu0 0
    %236 = vmatpush1.bf16.msra.mxu0 %v180
    %237 = vmatprep.subr.bf16.mxu0 0
    %238 = vmatpush1.bf16.msra.mxu0 %v183
    %239 = vmatprep.subr.bf16.mxu0 0
    %240 = vmatpush1.bf16.msra.mxu0 0
    %241 = vmatprep.subr.bf16.mxu0 0
    %242 = vmatpush1.bf16.msra.mxu0 0
    %243 = vmatprep.subr.bf16.mxu0 0
    %244 = vmatpush1.bf16.msra.mxu0 0
    %245 = vmatprep.subr.bf16.mxu0 0
    %246 = vmatpush1.bf16.msra.mxu0 0
    %247 = vmatprep.subr.bf16.mxu0 0
    %248 = vmatpush1.bf16.msra.mxu0 0
    %249 = vmatprep.subr.bf16.mxu0 0
    %250 = vmatpush1.bf16.msra.mxu0 0
    %251 = vmatprep.subr.bf16.mxu0 0
    %252 = vmatpush1.bf16.msra.mxu0 0
    %253 = vmatprep.subr.bf16.mxu0 0
    %254 = vmatpush1.bf16.msra.mxu0 0
    %255 = vmatprep.subr.bf16.mxu0 0
    %256 = vmatpush1.bf16.msra.mxu0 0
    %257 = vmatprep.subr.bf16.mxu0 0
    %258 = vmatpush1.bf16.msra.mxu0 0
    %259 = vmatprep.subr.bf16.mxu0 0
    %260 = vmatpush1.bf16.msra.mxu0 0
    %261 = vmatprep.subr.bf16.mxu0 0
    %262 = vmatpush1.bf16.msra.mxu0 0
    %263 = vmatprep.subr.bf16.mxu0 0
    %264 = vmatpush1.bf16.msra.mxu0 0
    %265 = vmatprep.subr.bf16.mxu0 0
    %266 = vmatpush1.bf16.msra.mxu0 0
    %267 = vmatprep.mubr.bf16.mxu0 0
    %268 = vmatmul.mubr.bf16.gmra.mrb[0].mxu0 %v192
    %v269 = vpop.f32.mrb[0].mxu0
    %v270 = vadd.f32 %v144, %v269
    %v271 = vpop.f32.mrb[0].mxu0
    %v272 = vpop.f32.mrb[0].mxu0
    %v273 = vpop.f32.mrb[0].mxu0
    %274 = vdwg.mxu0
    %v307 = vunpack.c.l.b16 %v99
    %v308 = vunpack.c.h.b16 %v99
    %v309 = vunpack.c.l.b16 %v100
    %v310 = vunpack.c.l.b16 %v101
    %v311 = vunpack.c.h.b16 %v101
    %v312 = vunpack.c.l.b16 %v102
    %v313 = vunpack.c.l.b16 %v103
    %v314 = vunpack.c.h.b16 %v103
    %v315 = vunpack.c.l.b16 %v104
    %v316 = vunpack.c.l.b16 %v105
    %v317 = vunpack.c.h.b16 %v105
    %v318 = vunpack.c.l.b16 %v106
    %v319 = vunpack.c.l.b16 %v107
    %v320 = vunpack.c.h.b16 %v107
    %v321 = vunpack.c.l.b16 %v108
    %v322 = vunpack.c.l.b16 %v109
    %v323 = vunpack.c.h.b16 %v109
    %v324 = vunpack.c.l.b16 %v110
    %v325 = vunpack.c.l.b16 %v111
    %v326 = vunpack.c.h.b16 %v111
    %v327 = vunpack.c.l.b16 %v112
    %v328 = vunpack.c.l.b16 %v113
    %v329 = vunpack.c.h.b16 %v113
    %v330 = vunpack.c.l.b16 %v114
    %v331 = vunpack.c.l.b16 %v115
    %v332 = vunpack.c.h.b16 %v115
    %v333 = vunpack.c.l.b16 %v116
    %v334 = vunpack.c.l.b16 %v117
    %v335 = vunpack.c.h.b16 %v117
    %v336 = vunpack.c.l.b16 %v118
    %v337 = vunpack.c.l.b16 %v119
    %v338 = vunpack.c.h.b16 %v119
    %v339 = vunpack.c.l.b16 %v120
    %v340 = vunpack.c.l.b16 %v121
    %v341 = vunpack.c.h.b16 %v121
    %v342 = vunpack.c.l.b16 %v122
    %v343 = vunpack.c.l.b16 %v123
    %v344 = vunpack.c.h.b16 %v123
    %v345 = vunpack.c.l.b16 %v124
    %v346 = vunpack.c.l.b16 %v125
    %v347 = vunpack.c.h.b16 %v125
    %v348 = vunpack.c.l.b16 %v126
    %v349 = vunpack.c.l.b16 %v127
    %v350 = vunpack.c.h.b16 %v127
    %v351 = vunpack.c.l.b16 %v128
    %v352 = vunpack.c.l.b16 %v129
    %v353 = vunpack.c.h.b16 %v129
    %v354 = vunpack.c.l.b16 %v130
    %v355 = vpack.c.b16 %v310, %v307
    %v356 = vpack.c.b16 %v311, %v308
    %v357 = vpack.c.b16 %v312, %v309
    %v358 = vpack.c.b16 %v316, %v313
    %v359 = vpack.c.b16 %v317, %v314
    %v360 = vpack.c.b16 %v318, %v315
    %v361 = vpack.c.b16 %v322, %v319
    %v362 = vpack.c.b16 %v323, %v320
    %v363 = vpack.c.b16 %v324, %v321
    %v364 = vpack.c.b16 %v328, %v325
    %v365 = vpack.c.b16 %v329, %v326
    %v366 = vpack.c.b16 %v330, %v327
    %v367 = vpack.c.b16 %v334, %v331
    %v368 = vpack.c.b16 %v335, %v332
    %v369 = vpack.c.b16 %v336, %v333
    %v370 = vpack.c.b16 %v340, %v337
    %v371 = vpack.c.b16 %v341, %v338
    %v372 = vpack.c.b16 %v342, %v339
    %v373 = vpack.c.b16 %v346, %v343
    %v374 = vpack.c.b16 %v347, %v344
    %v375 = vpack.c.b16 %v348, %v345
    %v376 = vpack.c.b16 %v352, %v349
    %v377 = vpack.c.b16 %v353, %v350
    %v378 = vpack.c.b16 %v354, %v351
    %403 = vmatprep.subr.bf16.mxu0 %v356
    %404 = vmatpush1.bf16.msra.mxu0 %v355
    %405 = vmatprep.subr.bf16.mxu0 %v359
    %406 = vmatpush1.bf16.msra.mxu0 %v358
    %407 = vmatprep.subr.bf16.mxu0 %v362
    %408 = vmatpush1.bf16.msra.mxu0 %v361
    %409 = vmatprep.subr.bf16.mxu0 %v365
    %410 = vmatpush1.bf16.msra.mxu0 %v364
    %411 = vmatprep.subr.bf16.mxu0 %v368
    %412 = vmatpush1.bf16.msra.mxu0 %v367
    %413 = vmatprep.subr.bf16.mxu0 %v371
    %414 = vmatpush1.bf16.msra.mxu0 %v370
    %415 = vmatprep.subr.bf16.mxu0 %v374
    %416 = vmatpush1.bf16.msra.mxu0 %v373
    %417 = vmatprep.subr.bf16.mxu0 %v377
    %418 = vmatpush1.bf16.msra.mxu0 %v376
    %419 = vmatprep.subr.bf16.mxu0 0
    %420 = vmatpush1.bf16.msra.mxu0 0
    %421 = vmatprep.subr.bf16.mxu0 0
    %422 = vmatpush1.bf16.msra.mxu0 0
    %423 = vmatprep.subr.bf16.mxu0 0
    %424 = vmatpush1.bf16.msra.mxu0 0
    %425 = vmatprep.subr.bf16.mxu0 0
    %426 = vmatpush1.bf16.msra.mxu0 0
    %427 = vmatprep.subr.bf16.mxu0 0
    %428 = vmatpush1.bf16.msra.mxu0 0
    %429 = vmatprep.subr.bf16.mxu0 0
    %430 = vmatpush1.bf16.msra.mxu0 0
    %431 = vmatprep.subr.bf16.mxu0 0
    %432 = vmatpush1.bf16.msra.mxu0 0
    %433 = vmatprep.subr.bf16.mxu0 0
    %434 = vmatpush1.bf16.msra.mxu0 0
    %435 = vmatprep.mubr.bf16.mxu0 0
    %436 = vmatmul.mubr.bf16.gmra.mrb[0].mxu0 %v156
    %v437 = vpop.f32.mrb[0].mxu0
    %v438 = vadd.f32 0.0, %v437
    %v439 = vpop.f32.mrb[0].mxu0
    %v440 = vadd.f32 0.0, %v439
    %v441 = vpop.f32.mrb[0].mxu0
    %v442 = vpop.f32.mrb[0].mxu0
    %443 = vdwg.mxu0
    %444 = vmatprep.subr.bf16.mxu0 0
    %445 = vmatpush1.bf16.msra.mxu0 %v357
    %446 = vmatprep.subr.bf16.mxu0 0
    %447 = vmatpush1.bf16.msra.mxu0 %v360
    %448 = vmatprep.subr.bf16.mxu0 0
    %449 = vmatpush1.bf16.msra.mxu0 %v363
    %450 = vmatprep.subr.bf16.mxu0 0
    %451 = vmatpush1.bf16.msra.mxu0 %v366
    %452 = vmatprep.subr.bf16.mxu0 0
    %453 = vmatpush1.bf16.msra.mxu0 %v369
    %454 = vmatprep.subr.bf16.mxu0 0
    %455 = vmatpush1.bf16.msra.mxu0 %v372
    %456 = vmatprep.subr.bf16.mxu0 0
    %457 = vmatpush1.bf16.msra.mxu0 %v375
    %458 = vmatprep.subr.bf16.mxu0 0
    %459 = vmatpush1.bf16.msra.mxu0 %v378
    %460 = vmatprep.subr.bf16.mxu0 0
    %461 = vmatpush1.bf16.msra.mxu0 0
    %462 = vmatprep.subr.bf16.mxu0 0
    %463 = vmatpush1.bf16.msra.mxu0 0
    %464 = vmatprep.subr.bf16.mxu0 0
    %465 = vmatpush1.bf16.msra.mxu0 0
    %466 = vmatprep.subr.bf16.mxu0 0
    %467 = vmatpush1.bf16.msra.mxu0 0
    %468 = vmatprep.subr.bf16.mxu0 0
    %469 = vmatpush1.bf16.msra.mxu0 0
    %470 = vmatprep.subr.bf16.mxu0 0
    %471 = vmatpush1.bf16.msra.mxu0 0
    %472 = vmatprep.subr.bf16.mxu0 0
    %473 = vmatpush1.bf16.msra.mxu0 0
    %474 = vmatprep.subr.bf16.mxu0 0
    %475 = vmatpush1.bf16.msra.mxu0 0
    %476 = vmatprep.mubr.bf16.mxu0 0
    %477 = vmatmul.mubr.bf16.gmra.mrb[0].mxu0 %v156
    %v478 = vpop.f32.mrb[0].mxu0
    %v479 = vadd.f32 0.0, %v478
    %v480 = vpop.f32.mrb[0].mxu0
    %v481 = vpop.f32.mrb[0].mxu0
    %v482 = vpop.f32.mrb[0].mxu0
    %483 = vdwg.mxu0
    %v484 = vadd.f32 %v229, %v438
    %v485 = vxor.u32 %v484, 2147483648
    %v486 = vmul.f32 %v485, 1.442695
    %v487 = vpow.pop %v486
    %v488 = vadd.f32 %v487, 1.0
    %v489 = vrcp.pop %v488
    %v490 = vmul.f32 1.0, %v489
    %v491 = vadd.f32 %v231, %v440
    %v492 = vxor.u32 %v491, 2147483648
    %v493 = vmul.f32 %v492, 1.442695
    %v494 = vpow.pop %v493
    %v495 = vadd.f32 %v494, 1.0
    %v496 = vrcp.pop %v495
    %v497 = vmul.f32 1.0, %v496
    %v498 = vadd.f32 %v479, %v153
    %v499 = vmul.f32 %v490, %v498
    %v500 = vadd.f32 %v270, %v499
    %v501 = vtanh.pop %v500
    %v502 = vsub.f32 %v155, %v501
    %v503 = vmul.f32 %v497, %v502
    %v504 = vadd.f32 %v501, %v503
    %v505 = vpack.c.bf16 %v504, %v504
    %506 = vst [vmem:[#allocation12] sm:$0xf] %v505
    %s507 = scalar_lea.vmem [#allocation3], 4
    %v508 = vld [vmem:[%s507] sm:$0xf]
    %v510 = vsel %vm190, %v508, 0
    %512 = vmatprep.subr.bf16.mxu0 %v179
    %513 = vmatpush1.bf16.msra.mxu0 %v178
    %514 = vmatprep.subr.bf16.mxu0 %v182
    %515 = vmatpush1.bf16.msra.mxu0 %v181
    %516 = vmatprep.subr.bf16.mxu0 0
    %517 = vmatpush1.bf16.msra.mxu0 0
    %518 = vmatprep.subr.bf16.mxu0 0
    %519 = vmatpush1.bf16.msra.mxu0 0
    %520 = vmatprep.subr.bf16.mxu0 0
    %521 = vmatpush1.bf16.msra.mxu0 0
    %522 = vmatprep.subr.bf16.mxu0 0
    %523 = vmatpush1.bf16.msra.mxu0 0
    %524 = vmatprep.subr.bf16.mxu0 0
    %525 = vmatpush1.bf16.msra.mxu0 0
    %526 = vmatprep.subr.bf16.mxu0 0
    %527 = vmatpush1.bf16.msra.mxu0 0
    %528 = vmatprep.subr.bf16.mxu0 0
    %529 = vmatpush1.bf16.msra.mxu0 0
    %530 = vmatprep.subr.bf16.mxu0 0
    %531 = vmatpush1.bf16.msra.mxu0 0
    %532 = vmatprep.subr.bf16.mxu0 0
    %533 = vmatpush1.bf16.msra.mxu0 0
    %534 = vmatprep.subr.bf16.mxu0 0
    %535 = vmatpush1.bf16.msra.mxu0 0
    %536 = vmatprep.subr.bf16.mxu0 0
    %537 = vmatpush1.bf16.msra.mxu0 0
    %538 = vmatprep.subr.bf16.mxu0 0
    %539 = vmatpush1.bf16.msra.mxu0 0
    %540 = vmatprep.subr.bf16.mxu0 0
    %541 = vmatpush1.bf16.msra.mxu0 0
    %542 = vmatprep.subr.bf16.mxu0 0
    %543 = vmatpush1.bf16.msra.mxu0 0
    %544 = vmatprep.mubr.bf16.mxu0 0
    %545 = vmatmul.mubr.bf16.gmra.mrb[0].mxu0 %v510
    %v546 = vpop.f32.mrb[0].mxu0
    %v547 = vadd.f32 %v136, %v546
    %v548 = vpop.f32.mrb[0].mxu0
    %v549 = vadd.f32 %v140, %v548
    %v550 = vpop.f32.mrb[0].mxu0
    %v551 = vpop.f32.mrb[0].mxu0
    %552 = vdwg.mxu0
    %553 = vmatprep.subr.bf16.mxu0 0
    %554 = vmatpush1.bf16.msra.mxu0 %v180
    %555 = vmatprep.subr.bf16.mxu0 0
    %556 = vmatpush1.bf16.msra.mxu0 %v183
    %557 = vmatprep.subr.bf16.mxu0 0
    %558 = vmatpush1.bf16.msra.mxu0 0
    %559 = vmatprep.subr.bf16.mxu0 0
    %560 = vmatpush1.bf16.msra.mxu0 0
    %561 = vmatprep.subr.bf16.mxu0 0
    %562 = vmatpush1.bf16.msra.mxu0 0
    %563 = vmatprep.subr.bf16.mxu0 0
    %564 = vmatpush1.bf16.msra.mxu0 0
    %565 = vmatprep.subr.bf16.mxu0 0
    %566 = vmatpush1.bf16.msra.mxu0 0
    %567 = vmatprep.subr.bf16.mxu0 0
    %568 = vmatpush1.bf16.msra.mxu0 0
    %569 = vmatprep.subr.bf16.mxu0 0
    %570 = vmatpush1.bf16.msra.mxu0 0
    %571 = vmatprep.subr.bf16.mxu0 0
    %572 = vmatpush1.bf16.msra.mxu0 0
    %573 = vmatprep.subr.bf16.mxu0 0
    %574 = vmatpush1.bf16.msra.mxu0 0
    %575 = vmatprep.subr.bf16.mxu0 0
    %576 = vmatpush1.bf16.msra.mxu0 0
    %577 = vmatprep.subr.bf16.mxu0 0
    %578 = vmatpush1.bf16.msra.mxu0 0
    %579 = vmatprep.subr.bf16.mxu0 0
    %580 = vmatpush1.bf16.msra.mxu0 0
    %581 = vmatprep.subr.bf16.mxu0 0
    %582 = vmatpush1.bf16.msra.mxu0 0
    %583 = vmatprep.subr.bf16.mxu0 0
    %584 = vmatpush1.bf16.msra.mxu0 0
    %585 = vmatprep.mubr.bf16.mxu0 0
    %586 = vmatmul.mubr.bf16.gmra.mrb[0].mxu0 %v510
    %v587 = vpop.f32.mrb[0].mxu0
    %v588 = vadd.f32 %v144, %v587
    %v589 = vpop.f32.mrb[0].mxu0
    %v590 = vpop.f32.mrb[0].mxu0
    %v591 = vpop.f32.mrb[0].mxu0
    %592 = vdwg.mxu0
    %593 = vmatprep.subr.bf16.mxu0 %v356
    %594 = vmatpush1.bf16.msra.mxu0 %v355
    %595 = vmatprep.subr.bf16.mxu0 %v359
    %596 = vmatpush1.bf16.msra.mxu0 %v358
    %597 = vmatprep.subr.bf16.mxu0 %v362
    %598 = vmatpush1.bf16.msra.mxu0 %v361
    %599 = vmatprep.subr.bf16.mxu0 %v365
    %600 = vmatpush1.bf16.msra.mxu0 %v364
    %601 = vmatprep.subr.bf16.mxu0 %v368
    %602 = vmatpush1.bf16.msra.mxu0 %v367
    %603 = vmatprep.subr.bf16.mxu0 %v371
    %604 = vmatpush1.bf16.msra.mxu0 %v370
    %605 = vmatprep.subr.bf16.mxu0 %v374
    %606 = vmatpush1.bf16.msra.mxu0 %v373
    %607 = vmatprep.subr.bf16.mxu0 %v377
    %608 = vmatpush1.bf16.msra.mxu0 %v376
    %609 = vmatprep.subr.bf16.mxu0 0
    %610 = vmatpush1.bf16.msra.mxu0 0
    %611 = vmatprep.subr.bf16.mxu0 0
    %612 = vmatpush1.bf16.msra.mxu0 0
    %613 = vmatprep.subr.bf16.mxu0 0
    %614 = vmatpush1.bf16.msra.mxu0 0
    %615 = vmatprep.subr.bf16.mxu0 0
    %616 = vmatpush1.bf16.msra.mxu0 0
    %617 = vmatprep.subr.bf16.mxu0 0
    %618 = vmatpush1.bf16.msra.mxu0 0
    %619 = vmatprep.subr.bf16.mxu0 0
    %620 = vmatpush1.bf16.msra.mxu0 0
    %621 = vmatprep.subr.bf16.mxu0 0
    %622 = vmatpush1.bf16.msra.mxu0 0
    %623 = vmatprep.subr.bf16.mxu0 0
    %624 = vmatpush1.bf16.msra.mxu0 0
    %625 = vmatprep.mubr.bf16.mxu0 0
    %626 = vmatmul.mubr.bf16.gmra.mrb[0].mxu0 %v505
    %v627 = vpop.f32.mrb[0].mxu0
    %v628 = vadd.f32 0.0, %v627
    %v629 = vpop.f32.mrb[0].mxu0
    %v630 = vadd.f32 0.0, %v629
    %v631 = vpop.f32.mrb[0].mxu0
    %v632 = vpop.f32.mrb[0].mxu0
    %633 = vdwg.mxu0
    %634 = vmatprep.subr.bf16.mxu0 0
    %635 = vmatpush1.bf16.msra.mxu0 %v357
    %636 = vmatprep.subr.bf16.mxu0 0
    %637 = vmatpush1.bf16.msra.mxu0 %v360
    %638 = vmatprep.subr.bf16.mxu0 0
    %639 = vmatpush1.bf16.msra.mxu0 %v363
    %640 = vmatprep.subr.bf16.mxu0 0
    %641 = vmatpush1.bf16.msra.mxu0 %v366
    %642 = vmatprep.subr.bf16.mxu0 0
    %643 = vmatpush1.bf16.msra.mxu0 %v369
    %644 = vmatprep.subr.bf16.mxu0 0
    %645 = vmatpush1.bf16.msra.mxu0 %v372
    %646 = vmatprep.subr.bf16.mxu0 0
    %647 = vmatpush1.bf16.msra.mxu0 %v375
    %648 = vmatprep.subr.bf16.mxu0 0
    %649 = vmatpush1.bf16.msra.mxu0 %v378
    %650 = vmatprep.subr.bf16.mxu0 0
    %651 = vmatpush1.bf16.msra.mxu0 0
    %652 = vmatprep.subr.bf16.mxu0 0
    %653 = vmatpush1.bf16.msra.mxu0 0
    %654 = vmatprep.subr.bf16.mxu0 0
    %655 = vmatpush1.bf16.msra.mxu0 0
    %656 = vmatprep.subr.bf16.mxu0 0
    %657 = vmatpush1.bf16.msra.mxu0 0
    %658 = vmatprep.subr.bf16.mxu0 0
    %659 = vmatpush1.bf16.msra.mxu0 0
    %660 = vmatprep.subr.bf16.mxu0 0
    %661 = vmatpush1.bf16.msra.mxu0 0
    %662 = vmatprep.subr.bf16.mxu0 0
    %663 = vmatpush1.bf16.msra.mxu0 0
    %664 = vmatprep.subr.bf16.mxu0 0
    %665 = vmatpush1.bf16.msra.mxu0 0
    %666 = vmatprep.mubr.bf16.mxu0 0
    %667 = vmatmul.mubr.bf16.gmra.mrb[0].mxu0 %v505
    %v668 = vpop.f32.mrb[0].mxu0
    %v669 = vadd.f32 0.0, %v668
    %v670 = vpop.f32.mrb[0].mxu0
    %v671 = vpop.f32.mrb[0].mxu0
    %v672 = vpop.f32.mrb[0].mxu0
    %673 = vdwg.mxu0
    %v674 = vadd.f32 %v547, %v628
    %v675 = vxor.u32 %v674, 2147483648
    %v676 = vmul.f32 %v675, 1.442695
    %v677 = vpow.pop %v676
    %v678 = vadd.f32 %v677, 1.0
    %v679 = vrcp.pop %v678
    %v680 = vmul.f32 1.0, %v679
    %v681 = vadd.f32 %v549, %v630
    %v682 = vxor.u32 %v681, 2147483648
    %v683 = vmul.f32 %v682, 1.442695
    %v684 = vpow.pop %v683
    %v685 = vadd.f32 %v684, 1.0
    %v686 = vrcp.pop %v685
    %v687 = vmul.f32 1.0, %v686
    %v688 = vadd.f32 %v669, %v153
    %v689 = vmul.f32 %v680, %v688
    %v690 = vadd.f32 %v588, %v689
    %v691 = vtanh.pop %v690
    %v692 = vsub.f32 %v504, %v691
    %v693 = vmul.f32 %v687, %v692
    %v694 = vadd.f32 %v691, %v693
    %v695 = vpack.c.bf16 %v694, %v694
    %s696 = scalar_lea.vmem [#allocation12], 4
    %697 = vst [vmem:[%s696] sm:$0xf] %v695
    %s698 = scalar_lea.vmem [#allocation3], 8
    %v699 = vld [vmem:[%s698] sm:$0xf]
    %v701 = vsel %vm190, %v699, 0
    %703 = vmatprep.subr.bf16.mxu0 %v179
    %704 = vmatpush1.bf16.msra.mxu0 %v178
    %705 = vmatprep.subr.bf16.mxu0 %v182
    %706 = vmatpush1.bf16.msra.mxu0 %v181
    %707 = vmatprep.subr.bf16.mxu0 0
    %708 = vmatpush1.bf16.msra.mxu0 0
    %709 = vmatprep.subr.bf16.mxu0 0
    %710 = vmatpush1.bf16.msra.mxu0 0
    %711 = vmatprep.subr.bf16.mxu0 0
    %712 = vmatpush1.bf16.msra.mxu0 0
    %713 = vmatprep.subr.bf16.mxu0 0
    %714 = vmatpush1.bf16.msra.mxu0 0
    %715 = vmatprep.subr.bf16.mxu0 0
    %716 = vmatpush1.bf16.msra.mxu0 0
    %717 = vmatprep.subr.bf16.mxu0 0
    %718 = vmatpush1.bf16.msra.mxu0 0
    %719 = vmatprep.subr.bf16.mxu0 0
    %720 = vmatpush1.bf16.msra.mxu0 0
    %721 = vmatprep.subr.bf16.mxu0 0
    %722 = vmatpush1.bf16.msra.mxu0 0
    %723 = vmatprep.subr.bf16.mxu0 0
    %724 = vmatpush1.bf16.msra.mxu0 0
    %725 = vmatprep.subr.bf16.mxu0 0
    %726 = vmatpush1.bf16.msra.mxu0 0
    %727 = vmatprep.subr.bf16.mxu0 0
    %728 = vmatpush1.bf16.msra.mxu0 0
    %729 = vmatprep.subr.bf16.mxu0 0
    %730 = vmatpush1.bf16.msra.mxu0 0
    %731 = vmatprep.subr.bf16.mxu0 0
    %732 = vmatpush1.bf16.msra.mxu0 0
    %733 = vmatprep.subr.bf16.mxu0 0
    %734 = vmatpush1.bf16.msra.mxu0 0
    %735 = vmatprep.mubr.bf16.mxu0 0
    %736 = vmatmul.mubr.bf16.gmra.mrb[0].mxu0 %v701
    %v737 = vpop.f32.mrb[0].mxu0
    %v738 = vadd.f32 %v136, %v737
    %v739 = vpop.f32.mrb[0].mxu0
    %v740 = vadd.f32 %v140, %v739
    %v741 = vpop.f32.mrb[0].mxu0
    %v742 = vpop.f32.mrb[0].mxu0
    %743 = vdwg.mxu0
    %744 = vmatprep.subr.bf16.mxu0 0
    %745 = vmatpush1.bf16.msra.mxu0 %v180
    %746 = vmatprep.subr.bf16.mxu0 0
    %747 = vmatpush1.bf16.msra.mxu0 %v183
    %748 = vmatprep.subr.bf16.mxu0 0
    %749 = vmatpush1.bf16.msra.mxu0 0
    %750 = vmatprep.subr.bf16.mxu0 0
    %751 = vmatpush1.bf16.msra.mxu0 0
    %752 = vmatprep.subr.bf16.mxu0 0
    %753 = vmatpush1.bf16.msra.mxu0 0
    %754 = vmatprep.subr.bf16.mxu0 0
    %755 = vmatpush1.bf16.msra.mxu0 0
    %756 = vmatprep.subr.bf16.mxu0 0
    %757 = vmatpush1.bf16.msra.mxu0 0
    %758 = vmatprep.subr.bf16.mxu0 0
    %759 = vmatpush1.bf16.msra.mxu0 0
    %760 = vmatprep.subr.bf16.mxu0 0
    %761 = vmatpush1.bf16.msra.mxu0 0
    %762 = vmatprep.subr.bf16.mxu0 0
    %763 = vmatpush1.bf16.msra.mxu0 0
    %764 = vmatprep.subr.bf16.mxu0 0
    %765 = vmatpush1.bf16.msra.mxu0 0
    %766 = vmatprep.subr.bf16.mxu0 0
    %767 = vmatpush1.bf16.msra.mxu0 0
    %768 = vmatprep.subr.bf16.mxu0 0
    %769 = vmatpush1.bf16.msra.mxu0 0
    %770 = vmatprep.subr.bf16.mxu0 0
    %771 = vmatpush1.bf16.msra.mxu0 0
    %772 = vmatprep.subr.bf16.mxu0 0
    %773 = vmatpush1.bf16.msra.mxu0 0
    %774 = vmatprep.subr.bf16.mxu0 0
    %775 = vmatpush1.bf16.msra.mxu0 0
    %776 = vmatprep.mubr.bf16.mxu0 0
    %777 = vmatmul.mubr.bf16.gmra.mrb[0].mxu0 %v701
    %v778 = vpop.f32.mrb[0].mxu0
    %v779 = vadd.f32 %v144, %v778
    %v780 = vpop.f32.mrb[0].mxu0
    %v781 = vpop.f32.mrb[0].mxu0
    %v782 = vpop.f32.mrb[0].mxu0
    %783 = vdwg.mxu0
    %784 = vmatprep.subr.bf16.mxu0 %v356
    %785 = vmatpush1.bf16.msra.mxu0 %v355
    %786 = vmatprep.subr.bf16.mxu0 %v359
    %787 = vmatpush1.bf16.msra.mxu0 %v358
    %788 = vmatprep.subr.bf16.mxu0 %v362
    %789 = vmatpush1.bf16.msra.mxu0 %v361
    %790 = vmatprep.subr.bf16.mxu0 %v365
    %791 = vmatpush1.bf16.msra.mxu0 %v364
    %792 = vmatprep.subr.bf16.mxu0 %v368
    %793 = vmatpush1.bf16.msra.mxu0 %v367
    %794 = vmatprep.subr.bf16.mxu0 %v371
    %795 = vmatpush1.bf16.msra.mxu0 %v370
    %796 = vmatprep.subr.bf16.mxu0 %v374
    %797 = vmatpush1.bf16.msra.mxu0 %v373
    %798 = vmatprep.subr.bf16.mxu0 %v377
    %799 = vmatpush1.bf16.msra.mxu0 %v376
    %800 = vmatprep.subr.bf16.mxu0 0
    %801 = vmatpush1.bf16.msra.mxu0 0
    %802 = vmatprep.subr.bf16.mxu0 0
    %803 = vmatpush1.bf16.msra.mxu0 0
    %804 = vmatprep.subr.bf16.mxu0 0
    %805 = vmatpush1.bf16.msra.mxu0 0
    %806 = vmatprep.subr.bf16.mxu0 0
    %807 = vmatpush1.bf16.msra.mxu0 0
    %808 = vmatprep.subr.bf16.mxu0 0
    %809 = vmatpush1.bf16.msra.mxu0 0
    %810 = vmatprep.subr.bf16.mxu0 0
    %811 = vmatpush1.bf16.msra.mxu0 0
    %812 = vmatprep.subr.bf16.mxu0 0
    %813 = vmatpush1.bf16.msra.mxu0 0
    %814 = vmatprep.subr.bf16.mxu0 0
    %815 = vmatpush1.bf16.msra.mxu0 0
    %816 = vmatprep.mubr.bf16.mxu0 0
    %817 = vmatmul.mubr.bf16.gmra.mrb[0].mxu0 %v695
    %v818 = vpop.f32.mrb[0].mxu0
    %v819 = vadd.f32 0.0, %v818
    %v820 = vpop.f32.mrb[0].mxu0
    %v821 = vadd.f32 0.0, %v820
    %v822 = vpop.f32.mrb[0].mxu0
    %v823 = vpop.f32.mrb[0].mxu0
    %824 = vdwg.mxu0
    %825 = vmatprep.subr.bf16.mxu0 0
    %826 = vmatpush1.bf16.msra.mxu0 %v357
    %827 = vmatprep.subr.bf16.mxu0 0
    %828 = vmatpush1.bf16.msra.mxu0 %v360
    %829 = vmatprep.subr.bf16.mxu0 0
    %830 = vmatpush1.bf16.msra.mxu0 %v363
    %831 = vmatprep.subr.bf16.mxu0 0
    %832 = vmatpush1.bf16.msra.mxu0 %v366
    %833 = vmatprep.subr.bf16.mxu0 0
    %834 = vmatpush1.bf16.msra.mxu0 %v369
    %835 = vmatprep.subr.bf16.mxu0 0
    %836 = vmatpush1.bf16.msra.mxu0 %v372
    %837 = vmatprep.subr.bf16.mxu0 0
    %838 = vmatpush1.bf16.msra.mxu0 %v375
    %839 = vmatprep.subr.bf16.mxu0 0
    %840 = vmatpush1.bf16.msra.mxu0 %v378
    %841 = vmatprep.subr.bf16.mxu0 0
    %842 = vmatpush1.bf16.msra.mxu0 0
    %843 = vmatprep.subr.bf16.mxu0 0
    %844 = vmatpush1.bf16.msra.mxu0 0
    %845 = vmatprep.subr.bf16.mxu0 0
    %846 = vmatpush1.bf16.msra.mxu0 0
    %847 = vmatprep.subr.bf16.mxu0 0
    %848 = vmatpush1.bf16.msra.mxu0 0
    %849 = vmatprep.subr.bf16.mxu0 0
    %850 = vmatpush1.bf16.msra.mxu0 0
    %851 = vmatprep.subr.bf16.mxu0 0
    %852 = vmatpush1.bf16.msra.mxu0 0
    %853 = vmatprep.subr.bf16.mxu0 0
    %854 = vmatpush1.bf16.msra.mxu0 0
    %855 = vmatprep.subr.bf16.mxu0 0
    %856 = vmatpush1.bf16.msra.mxu0 0
    %857 = vmatprep.mubr.bf16.mxu0 0
    %858 = vmatmul.mubr.bf16.gmra.mrb[0].mxu0 %v695
    %v859 = vpop.f32.mrb[0].mxu0
    %v860 = vadd.f32 0.0, %v859
    %v861 = vpop.f32.mrb[0].mxu0
    %v862 = vpop.f32.mrb[0].mxu0
    %v863 = vpop.f32.mrb[0].mxu0
    %864 = vdwg.mxu0
    %v865 = vadd.f32 %v738, %v819
    %v866 = vxor.u32 %v865, 2147483648
    %v867 = vmul.f32 %v866, 1.442695
    %v868 = vpow.pop %v867
    %v869 = vadd.f32 %v868, 1.0
    %v870 = vrcp.pop %v869
    %v871 = vmul.f32 1.0, %v870
    %v872 = vadd.f32 %v740, %v821
    %v873 = vxor.u32 %v872, 2147483648
    %v874 = vmul.f32 %v873, 1.442695
    %v875 = vpow.pop %v874
    %v876 = vadd.f32 %v875, 1.0
    %v877 = vrcp.pop %v876
    %v878 = vmul.f32 1.0, %v877
    %v879 = vadd.f32 %v860, %v153
    %v880 = vmul.f32 %v871, %v879
    %v881 = vadd.f32 %v779, %v880
    %v882 = vtanh.pop %v881
    %v883 = vsub.f32 %v694, %v882
    %v884 = vmul.f32 %v878, %v883
    %v885 = vadd.f32 %v882, %v884
    %v886 = vpack.c.bf16 %v885, %v885
    %s887 = scalar_lea.vmem [#allocation12], 8
    %888 = vst [vmem:[%s887] sm:$0xf] %v886
    %s889 = scalar_lea.vmem [#allocation3], 12
    %v890 = vld [vmem:[%s889] sm:$0xf]
    %v892 = vsel %vm190, %v890, 0
    %894 = vmatprep.subr.bf16.mxu0 %v179
    %895 = vmatpush1.bf16.msra.mxu0 %v178
    %896 = vmatprep.subr.bf16.mxu0 %v182
    %897 = vmatpush1.bf16.msra.mxu0 %v181
    %898 = vmatprep.subr.bf16.mxu0 0
    %899 = vmatpush1.bf16.msra.mxu0 0
    %900 = vmatprep.subr.bf16.mxu0 0
    %901 = vmatpush1.bf16.msra.mxu0 0
    %902 = vmatprep.subr.bf16.mxu0 0
    %903 = vmatpush1.bf16.msra.mxu0 0
    %904 = vmatprep.subr.bf16.mxu0 0
    %905 = vmatpush1.bf16.msra.mxu0 0
    %906 = vmatprep.subr.bf16.mxu0 0
    %907 = vmatpush1.bf16.msra.mxu0 0
    %908 = vmatprep.subr.bf16.mxu0 0
    %909 = vmatpush1.bf16.msra.mxu0 0
    %910 = vmatprep.subr.bf16.mxu0 0
    %911 = vmatpush1.bf16.msra.mxu0 0
    %912 = vmatprep.subr.bf16.mxu0 0
    %913 = vmatpush1.bf16.msra.mxu0 0
    %914 = vmatprep.subr.bf16.mxu0 0
    %915 = vmatpush1.bf16.msra.mxu0 0
    %916 = vmatprep.subr.bf16.mxu0 0
    %917 = vmatpush1.bf16.msra.mxu0 0
    %918 = vmatprep.subr.bf16.mxu0 0
    %919 = vmatpush1.bf16.msra.mxu0 0
    %920 = vmatprep.subr.bf16.mxu0 0
    %921 = vmatpush1.bf16.msra.mxu0 0
    %922 = vmatprep.subr.bf16.mxu0 0
    %923 = vmatpush1.bf16.msra.mxu0 0
    %924 = vmatprep.subr.bf16.mxu0 0
    %925 = vmatpush1.bf16.msra.mxu0 0
    %926 = vmatprep.mubr.bf16.mxu0 0
    %927 = vmatmul.mubr.bf16.gmra.mrb[0].mxu0 %v892
    %v928 = vpop.f32.mrb[0].mxu0
    %v929 = vadd.f32 %v136, %v928
    %v930 = vpop.f32.mrb[0].mxu0
    %v931 = vadd.f32 %v140, %v930
    %v932 = vpop.f32.mrb[0].mxu0
    %v933 = vpop.f32.mrb[0].mxu0
    %934 = vdwg.mxu0
    %935 = vmatprep.subr.bf16.mxu0 0
    %936 = vmatpush1.bf16.msra.mxu0 %v180
    %937 = vmatprep.subr.bf16.mxu0 0
    %938 = vmatpush1.bf16.msra.mxu0 %v183
    %939 = vmatprep.subr.bf16.mxu0 0
    %940 = vmatpush1.bf16.msra.mxu0 0
    %941 = vmatprep.subr.bf16.mxu0 0
    %942 = vmatpush1.bf16.msra.mxu0 0
    %943 = vmatprep.subr.bf16.mxu0 0
    %944 = vmatpush1.bf16.msra.mxu0 0
    %945 = vmatprep.subr.bf16.mxu0 0
    %946 = vmatpush1.bf16.msra.mxu0 0
    %947 = vmatprep.subr.bf16.mxu0 0
    %948 = vmatpush1.bf16.msra.mxu0 0
    %949 = vmatprep.subr.bf16.mxu0 0
    %950 = vmatpush1.bf16.msra.mxu0 0
    %951 = vmatprep.subr.bf16.mxu0 0
    %952 = vmatpush1.bf16.msra.mxu0 0
    %953 = vmatprep.subr.bf16.mxu0 0
    %954 = vmatpush1.bf16.msra.mxu0 0
    %955 = vmatprep.subr.bf16.mxu0 0
    %956 = vmatpush1.bf16.msra.mxu0 0
    %957 = vmatprep.subr.bf16.mxu0 0
    %958 = vmatpush1.bf16.msra.mxu0 0
    %959 = vmatprep.subr.bf16.mxu0 0
    %960 = vmatpush1.bf16.msra.mxu0 0
    %961 = vmatprep.subr.bf16.mxu0 0
    %962 = vmatpush1.bf16.msra.mxu0 0
    %963 = vmatprep.subr.bf16.mxu0 0
    %964 = vmatpush1.bf16.msra.mxu0 0
    %965 = vmatprep.subr.bf16.mxu0 0
    %966 = vmatpush1.bf16.msra.mxu0 0
    %967 = vmatprep.mubr.bf16.mxu0 0
    %968 = vmatmul.mubr.bf16.gmra.mrb[0].mxu0 %v892
    %v969 = vpop.f32.mrb[0].mxu0
    %v970 = vadd.f32 %v144, %v969
    %v971 = vpop.f32.mrb[0].mxu0
    %v972 = vpop.f32.mrb[0].mxu0
    %v973 = vpop.f32.mrb[0].mxu0
    %974 = vdwg.mxu0
    %975 = vmatprep.subr.bf16.mxu0 %v356
    %976 = vmatpush1.bf16.msra.mxu0 %v355
    %977 = vmatprep.subr.bf16.mxu0 %v359
    %978 = vmatpush1.bf16.msra.mxu0 %v358
    %979 = vmatprep.subr.bf16.mxu0 %v362
    %980 = vmatpush1.bf16.msra.mxu0 %v361
    %981 = vmatprep.subr.bf16.mxu0 %v365
    %982 = vmatpush1.bf16.msra.mxu0 %v364
    %983 = vmatprep.subr.bf16.mxu0 %v368
    %984 = vmatpush1.bf16.msra.mxu0 %v367
    %985 = vmatprep.subr.bf16.mxu0 %v371
    %986 = vmatpush1.bf16.msra.mxu0 %v370
    %987 = vmatprep.subr.bf16.mxu0 %v374
    %988 = vmatpush1.bf16.msra.mxu0 %v373
    %989 = vmatprep.subr.bf16.mxu0 %v377
    %990 = vmatpush1.bf16.msra.mxu0 %v376
    %991 = vmatprep.subr.bf16.mxu0 0
    %992 = vmatpush1.bf16.msra.mxu0 0
    %993 = vmatprep.subr.bf16.mxu0 0
    %994 = vmatpush1.bf16.msra.mxu0 0
    %995 = vmatprep.subr.bf16.mxu0 0
    %996 = vmatpush1.bf16.msra.mxu0 0
    %997 = vmatprep.subr.bf16.mxu0 0
    %998 = vmatpush1.bf16.msra.mxu0 0
    %999 = vmatprep.subr.bf16.mxu0 0
    %1000 = vmatpush1.bf16.msra.mxu0 0
    %1001 = vmatprep.subr.bf16.mxu0 0
    %1002 = vmatpush1.bf16.msra.mxu0 0
    %1003 = vmatprep.subr.bf16.mxu0 0
    %1004 = vmatpush1.bf16.msra.mxu0 0
    %1005 = vmatprep.subr.bf16.mxu0 0
    %1006 = vmatpush1.bf16.msra.mxu0 0
    %1007 = vmatprep.mubr.bf16.mxu0 0
    %1008 = vmatmul.mubr.bf16.gmra.mrb[0].mxu0 %v886
    %v1009 = vpop.f32.mrb[0].mxu0
    %v1010 = vadd.f32 0.0, %v1009
    %v1011 = vpop.f32.mrb[0].mxu0
    %v1012 = vadd.f32 0.0, %v1011
    %v1013 = vpop.f32.mrb[0].mxu0
    %v1014 = vpop.f32.mrb[0].mxu0
    %1015 = vdwg.mxu0
    %1016 = vmatprep.subr.bf16.mxu0 0
    %1017 = vmatpush1.bf16.msra.mxu0 %v357
    %1018 = vmatprep.subr.bf16.mxu0 0
    %1019 = vmatpush1.bf16.msra.mxu0 %v360
    %1020 = vmatprep.subr.bf16.mxu0 0
    %1021 = vmatpush1.bf16.msra.mxu0 %v363
    %1022 = vmatprep.subr.bf16.mxu0 0
    %1023 = vmatpush1.bf16.msra.mxu0 %v366
    %1024 = vmatprep.subr.bf16.mxu0 0
    %1025 = vmatpush1.bf16.msra.mxu0 %v369
    %1026 = vmatprep.subr.bf16.mxu0 0
    %1027 = vmatpush1.bf16.msra.mxu0 %v372
    %1028 = vmatprep.subr.bf16.mxu0 0
    %1029 = vmatpush1.bf16.msra.mxu0 %v375
    %1030 = vmatprep.subr.bf16.mxu0 0
    %1031 = vmatpush1.bf16.msra.mxu0 %v378
    %1032 = vmatprep.subr.bf16.mxu0 0
    %1033 = vmatpush1.bf16.msra.mxu0 0
    %1034 = vmatprep.subr.bf16.mxu0 0
    %1035 = vmatpush1.bf16.msra.mxu0 0
    %1036 = vmatprep.subr.bf16.mxu0 0
    %1037 = vmatpush1.bf16.msra.mxu0 0
    %1038 = vmatprep.subr.bf16.mxu0 0
    %1039 = vmatpush1.bf16.msra.mxu0 0
    %1040 = vmatprep.subr.bf16.mxu0 0
    %1041 = vmatpush1.bf16.msra.mxu0 0
    %1042 = vmatprep.subr.bf16.mxu0 0
    %1043 = vmatpush1.bf16.msra.mxu0 0
    %1044 = vmatprep.subr.bf16.mxu0 0
    %1045 = vmatpush1.bf16.msra.mxu0 0
    %1046 = vmatprep.subr.bf16.mxu0 0
    %1047 = vmatpush1.bf16.msra.mxu0 0
    %1048 = vmatprep.mubr.bf16.mxu0 0
    %1049 = vmatmul.mubr.bf16.gmra.mrb[0].mxu0 %v886
    %v1050 = vpop.f32.mrb[0].mxu0
    %v1051 = vadd.f32 0.0, %v1050
    %v1052 = vpop.f32.mrb[0].mxu0
    %v1053 = vpop.f32.mrb[0].mxu0
    %v1054 = vpop.f32.mrb[0].mxu0
    %1055 = vdwg.mxu0
    %v1056 = vadd.f32 %v929, %v1010
    %v1057 = vxor.u32 %v1056, 2147483648
    %v1058 = vmul.f32 %v1057, 1.442695
    %v1059 = vpow.pop %v1058
    %v1060 = vadd.f32 %v1059, 1.0
    %v1061 = vrcp.pop %v1060
    %v1062 = vmul.f32 1.0, %v1061
    %v1063 = vadd.f32 %v931, %v1012
    %v1064 = vxor.u32 %v1063, 2147483648
    %v1065 = vmul.f32 %v1064, 1.442695
    %v1066 = vpow.pop %v1065
    %v1067 = vadd.f32 %v1066, 1.0
    %v1068 = vrcp.pop %v1067
    %v1069 = vmul.f32 1.0, %v1068
    %v1070 = vadd.f32 %v1051, %v153
    %v1071 = vmul.f32 %v1062, %v1070
    %v1072 = vadd.f32 %v970, %v1071
    %v1073 = vtanh.pop %v1072
    %v1074 = vsub.f32 %v885, %v1073
    %v1075 = vmul.f32 %v1069, %v1074
    %v1076 = vadd.f32 %v1073, %v1075
    %v1077 = vpack.c.bf16 %v1076, %v1076
    %s1078 = scalar_lea.vmem [#allocation12], 12
    %1079 = vst [vmem:[%s1078] sm:$0xf] %v1077
    %s1080 = scalar_lea.vmem [#allocation3], 16
    %v1081 = vld [vmem:[%s1080] sm:$0xf]
    %v1083 = vsel %vm190, %v1081, 0
    %1085 = vmatprep.subr.bf16.mxu0 %v179
    %1086 = vmatpush1.bf16.msra.mxu0 %v178
    %1087 = vmatprep.subr.bf16.mxu0 %v182
    %1088 = vmatpush1.bf16.msra.mxu0 %v181
    %1089 = vmatprep.subr.bf16.mxu0 0
    %1090 = vmatpush1.bf16.msra.mxu0 0
    %1091 = vmatprep.subr.bf16.mxu0 0
    %1092 = vmatpush1.bf16.msra.mxu0 0
    %1093 = vmatprep.subr.bf16.mxu0 0
    %1094 = vmatpush1.bf16.msra.mxu0 0
    %1095 = vmatprep.subr.bf16.mxu0 0
    %1096 = vmatpush1.bf16.msra.mxu0 0
    %1097 = vmatprep.subr.bf16.mxu0 0
    %1098 = vmatpush1.bf16.msra.mxu0 0
    %1099 = vmatprep.subr.bf16.mxu0 0
    %1100 = vmatpush1.bf16.msra.mxu0 0
    %1101 = vmatprep.subr.bf16.mxu0 0
    %1102 = vmatpush1.bf16.msra.mxu0 0
    %1103 = vmatprep.subr.bf16.mxu0 0
    %1104 = vmatpush1.bf16.msra.mxu0 0
    %1105 = vmatprep.subr.bf16.mxu0 0
    %1106 = vmatpush1.bf16.msra.mxu0 0
    %1107 = vmatprep.subr.bf16.mxu0 0
    %1108 = vmatpush1.bf16.msra.mxu0 0
    %1109 = vmatprep.subr.bf16.mxu0 0
    %1110 = vmatpush1.bf16.msra.mxu0 0
    %1111 = vmatprep.subr.bf16.mxu0 0
    %1112 = vmatpush1.bf16.msra.mxu0 0
    %1113 = vmatprep.subr.bf16.mxu0 0
    %1114 = vmatpush1.bf16.msra.mxu0 0
    %1115 = vmatprep.subr.bf16.mxu0 0
    %1116 = vmatpush1.bf16.msra.mxu0 0
    %1117 = vmatprep.mubr.bf16.mxu0 0
    %1118 = vmatmul.mubr.bf16.gmra.mrb[0].mxu0 %v1083
    %v1119 = vpop.f32.mrb[0].mxu0
    %v1120 = vadd.f32 %v136, %v1119
    %v1121 = vpop.f32.mrb[0].mxu0
    %v1122 = vadd.f32 %v140, %v1121
    %v1123 = vpop.f32.mrb[0].mxu0
    %v1124 = vpop.f32.mrb[0].mxu0
    %1125 = vdwg.mxu0
    %1126 = vmatprep.subr.bf16.mxu0 0
    %1127 = vmatpush1.bf16.msra.mxu0 %v180
    %1128 = vmatprep.subr.bf16.mxu0 0
    %1129 = vmatpush1.bf16.msra.mxu0 %v183
    %1130 = vmatprep.subr.bf16.mxu0 0
    %1131 = vmatpush1.bf16.msra.mxu0 0
    %1132 = vmatprep.subr.bf16.mxu0 0
    %1133 = vmatpush1.bf16.msra.mxu0 0
    %1134 = vmatprep.subr.bf16.mxu0 0
    %1135 = vmatpush1.bf16.msra.mxu0 0
    %1136 = vmatprep.subr.bf16.mxu0 0
    %1137 = vmatpush1.bf16.msra.mxu0 0
    %1138 = vmatprep.subr.bf16.mxu0 0
    %1139 = vmatpush1.bf16.msra.mxu0 0
    %1140 = vmatprep.subr.bf16.mxu0 0
    %1141 = vmatpush1.bf16.msra.mxu0 0
    %1142 = vmatprep.subr.bf16.mxu0 0
    %1143 = vmatpush1.bf16.msra.mxu0 0
    %1144 = vmatprep.subr.bf16.mxu0 0
    %1145 = vmatpush1.bf16.msra.mxu0 0
    %1146 = vmatprep.subr.bf16.mxu0 0
    %1147 = vmatpush1.bf16.msra.mxu0 0
    %1148 = vmatprep.subr.bf16.mxu0 0
    %1149 = vmatpush1.bf16.msra.mxu0 0
    %1150 = vmatprep.subr.bf16.mxu0 0
    %1151 = vmatpush1.bf16.msra.mxu0 0
    %1152 = vmatprep.subr.bf16.mxu0 0
    %1153 = vmatpush1.bf16.msra.mxu0 0
    %1154 = vmatprep.subr.bf16.mxu0 0
    %1155 = vmatpush1.bf16.msra.mxu0 0
    %1156 = vmatprep.subr.bf16.mxu0 0
    %1157 = vmatpush1.bf16.msra.mxu0 0
    %1158 = vmatprep.mubr.bf16.mxu0 0
    %1159 = vmatmul.mubr.bf16.gmra.mrb[0].mxu0 %v1083
    %v1160 = vpop.f32.mrb[0].mxu0
    %v1161 = vadd.f32 %v144, %v1160
    %v1162 = vpop.f32.mrb[0].mxu0
    %v1163 = vpop.f32.mrb[0].mxu0
    %v1164 = vpop.f32.mrb[0].mxu0
    %1165 = vdwg.mxu0
    %1166 = vmatprep.subr.bf16.mxu0 %v356
    %1167 = vmatpush1.bf16.msra.mxu0 %v355
    %1168 = vmatprep.subr.bf16.mxu0 %v359
    %1169 = vmatpush1.bf16.msra.mxu0 %v358
    %1170 = vmatprep.subr.bf16.mxu0 %v362
    %1171 = vmatpush1.bf16.msra.mxu0 %v361
    %1172 = vmatprep.subr.bf16.mxu0 %v365
    %1173 = vmatpush1.bf16.msra.mxu0 %v364
    %1174 = vmatprep.subr.bf16.mxu0 %v368
    %1175 = vmatpush1.bf16.msra.mxu0 %v367
    %1176 = vmatprep.subr.bf16.mxu0 %v371
    %1177 = vmatpush1.bf16.msra.mxu0 %v370
    %1178 = vmatprep.subr.bf16.mxu0 %v374
    %1179 = vmatpush1.bf16.msra.mxu0 %v373
    %1180 = vmatprep.subr.bf16.mxu0 %v377
    %1181 = vmatpush1.bf16.msra.mxu0 %v376
    %1182 = vmatprep.subr.bf16.mxu0 0
    %1183 = vmatpush1.bf16.msra.mxu0 0
    %1184 = vmatprep.subr.bf16.mxu0 0
    %1185 = vmatpush1.bf16.msra.mxu0 0
    %1186 = vmatprep.subr.bf16.mxu0 0
    %1187 = vmatpush1.bf16.msra.mxu0 0
    %1188 = vmatprep.subr.bf16.mxu0 0
    %1189 = vmatpush1.bf16.msra.mxu0 0
    %1190 = vmatprep.subr.bf16.mxu0 0
    %1191 = vmatpush1.bf16.msra.mxu0 0
    %1192 = vmatprep.subr.bf16.mxu0 0
    %1193 = vmatpush1.bf16.msra.mxu0 0
    %1194 = vmatprep.subr.bf16.mxu0 0
    %1195 = vmatpush1.bf16.msra.mxu0 0
    %1196 = vmatprep.subr.bf16.mxu0 0
    %1197 = vmatpush1.bf16.msra.mxu0 0
    %1198 = vmatprep.mubr.bf16.mxu0 0
    %1199 = vmatmul.mubr.bf16.gmra.mrb[0].mxu0 %v1077
    %v1200 = vpop.f32.mrb[0].mxu0
    %v1201 = vadd.f32 0.0, %v1200
    %v1202 = vpop.f32.mrb[0].mxu0
    %v1203 = vadd.f32 0.0, %v1202
    %v1204 = vpop.f32.mrb[0].mxu0
    %v1205 = vpop.f32.mrb[0].mxu0
    %1206 = vdwg.mxu0
    %1207 = vmatprep.subr.bf16.mxu0 0
    %1208 = vmatpush1.bf16.msra.mxu0 %v357
    %1209 = vmatprep.subr.bf16.mxu0 0
    %1210 = vmatpush1.bf16.msra.mxu0 %v360
    %1211 = vmatprep.subr.bf16.mxu0 0
    %1212 = vmatpush1.bf16.msra.mxu0 %v363
    %1213 = vmatprep.subr.bf16.mxu0 0
    %1214 = vmatpush1.bf16.msra.mxu0 %v366
    %1215 = vmatprep.subr.bf16.mxu0 0
    %1216 = vmatpush1.bf16.msra.mxu0 %v369
    %1217 = vmatprep.subr.bf16.mxu0 0
    %1218 = vmatpush1.bf16.msra.mxu0 %v372
    %1219 = vmatprep.subr.bf16.mxu0 0
    %1220 = vmatpush1.bf16.msra.mxu0 %v375
    %1221 = vmatprep.subr.bf16.mxu0 0
    %1222 = vmatpush1.bf16.msra.mxu0 %v378
    %1223 = vmatprep.subr.bf16.mxu0 0
    %1224 = vmatpush1.bf16.msra.mxu0 0
    %1225 = vmatprep.subr.bf16.mxu0 0
    %1226 = vmatpush1.bf16.msra.mxu0 0
    %1227 = vmatprep.subr.bf16.mxu0 0
    %1228 = vmatpush1.bf16.msra.mxu0 0
    %1229 = vmatprep.subr.bf16.mxu0 0
    %1230 = vmatpush1.bf16.msra.mxu0 0
    %1231 = vmatprep.subr.bf16.mxu0 0
    %1232 = vmatpush1.bf16.msra.mxu0 0
    %1233 = vmatprep.subr.bf16.mxu0 0
    %1234 = vmatpush1.bf16.msra.mxu0 0
    %1235 = vmatprep.subr.bf16.mxu0 0
    %1236 = vmatpush1.bf16.msra.mxu0 0
    %1237 = vmatprep.subr.bf16.mxu0 0
    %1238 = vmatpush1.bf16.msra.mxu0 0
    %1239 = vmatprep.mubr.bf16.mxu0 0
    %1240 = vmatmul.mubr.bf16.gmra.mrb[0].mxu0 %v1077
    %v1241 = vpop.f32.mrb[0].mxu0
    %v1242 = vadd.f32 0.0, %v1241
    %v1243 = vpop.f32.mrb[0].mxu0
    %v1244 = vpop.f32.mrb[0].mxu0
    %v1245 = vpop.f32.mrb[0].mxu0
    %1246 = vdwg.mxu0
    %v1247 = vadd.f32 %v1120, %v1201
    %v1248 = vxor.u32 %v1247, 2147483648
    %v1249 = vmul.f32 %v1248, 1.442695
    %v1250 = vpow.pop %v1249
    %v1251 = vadd.f32 %v1250, 1.0
    %v1252 = vrcp.pop %v1251
    %v1253 = vmul.f32 1.0, %v1252
    %v1254 = vadd.f32 %v1122, %v1203
    %v1255 = vxor.u32 %v1254, 2147483648
    %v1256 = vmul.f32 %v1255, 1.442695
    %v1257 = vpow.pop %v1256
    %v1258 = vadd.f32 %v1257, 1.0
    %v1259 = vrcp.pop %v1258
    %v1260 = vmul.f32 1.0, %v1259
    %v1261 = vadd.f32 %v1242, %v153
    %v1262 = vmul.f32 %v1253, %v1261
    %v1263 = vadd.f32 %v1161, %v1262
    %v1264 = vtanh.pop %v1263
    %v1265 = vsub.f32 %v1076, %v1264
    %v1266 = vmul.f32 %v1260, %v1265
    %v1267 = vadd.f32 %v1264, %v1266
    %v1268 = vpack.c.bf16 %v1267, %v1267
    %s1269 = scalar_lea.vmem [#allocation12], 16
    %1270 = vst [vmem:[%s1269] sm:$0xf] %v1268
    %s1271 = scalar_lea.vmem [#allocation3], 20
    %v1272 = vld [vmem:[%s1271] sm:$0xf]
    %v1274 = vsel %vm190, %v1272, 0
    %1276 = vmatprep.subr.bf16.mxu0 %v179
    %1277 = vmatpush1.bf16.msra.mxu0 %v178
    %1278 = vmatprep.subr.bf16.mxu0 %v182
    %1279 = vmatpush1.bf16.msra.mxu0 %v181
    %1280 = vmatprep.subr.bf16.mxu0 0
    %1281 = vmatpush1.bf16.msra.mxu0 0
    %1282 = vmatprep.subr.bf16.mxu0 0
    %1283 = vmatpush1.bf16.msra.mxu0 0
    %1284 = vmatprep.subr.bf16.mxu0 0
    %1285 = vmatpush1.bf16.msra.mxu0 0
    %1286 = vmatprep.subr.bf16.mxu0 0
    %1287 = vmatpush1.bf16.msra.mxu0 0
    %1288 = vmatprep.subr.bf16.mxu0 0
    %1289 = vmatpush1.bf16.msra.mxu0 0
    %1290 = vmatprep.subr.bf16.mxu0 0
    %1291 = vmatpush1.bf16.msra.mxu0 0
    %1292 = vmatprep.subr.bf16.mxu0 0
    %1293 = vmatpush1.bf16.msra.mxu0 0
    %1294 = vmatprep.subr.bf16.mxu0 0
    %1295 = vmatpush1.bf16.msra.mxu0 0
    %1296 = vmatprep.subr.bf16.mxu0 0
    %1297 = vmatpush1.bf16.msra.mxu0 0
    %1298 = vmatprep.subr.bf16.mxu0 0
    %1299 = vmatpush1.bf16.msra.mxu0 0
    %1300 = vmatprep.subr.bf16.mxu0 0
    %1301 = vmatpush1.bf16.msra.mxu0 0
    %1302 = vmatprep.subr.bf16.mxu0 0
    %1303 = vmatpush1.bf16.msra.mxu0 0
    %1304 = vmatprep.subr.bf16.mxu0 0
    %1305 = vmatpush1.bf16.msra.mxu0 0
    %1306 = vmatprep.subr.bf16.mxu0 0
    %1307 = vmatpush1.bf16.msra.mxu0 0
    %1308 = vmatprep.mubr.bf16.mxu0 0
    %1309 = vmatmul.mubr.bf16.gmra.mrb[0].mxu0 %v1274
    %v1310 = vpop.f32.mrb[0].mxu0
    %v1311 = vadd.f32 %v136, %v1310
    %v1312 = vpop.f32.mrb[0].mxu0
    %v1313 = vadd.f32 %v140, %v1312
    %v1314 = vpop.f32.mrb[0].mxu0
    %v1315 = vpop.f32.mrb[0].mxu0
    %1316 = vdwg.mxu0
    %1317 = vmatprep.subr.bf16.mxu0 0
    %1318 = vmatpush1.bf16.msra.mxu0 %v180
    %1319 = vmatprep.subr.bf16.mxu0 0
    %1320 = vmatpush1.bf16.msra.mxu0 %v183
    %1321 = vmatprep.subr.bf16.mxu0 0
    %1322 = vmatpush1.bf16.msra.mxu0 0
    %1323 = vmatprep.subr.bf16.mxu0 0
    %1324 = vmatpush1.bf16.msra.mxu0 0
    %1325 = vmatprep.subr.bf16.mxu0 0
    %1326 = vmatpush1.bf16.msra.mxu0 0
    %1327 = vmatprep.subr.bf16.mxu0 0
    %1328 = vmatpush1.bf16.msra.mxu0 0
    %1329 = vmatprep.subr.bf16.mxu0 0
    %1330 = vmatpush1.bf16.msra.mxu0 0
    %1331 = vmatprep.subr.bf16.mxu0 0
    %1332 = vmatpush1.bf16.msra.mxu0 0
    %1333 = vmatprep.subr.bf16.mxu0 0
    %1334 = vmatpush1.bf16.msra.mxu0 0
    %1335 = vmatprep.subr.bf16.mxu0 0
    %1336 = vmatpush1.bf16.msra.mxu0 0
    %1337 = vmatprep.subr.bf16.mxu0 0
    %1338 = vmatpush1.bf16.msra.mxu0 0
    %1339 = vmatprep.subr.bf16.mxu0 0
    %1340 = vmatpush1.bf16.msra.mxu0 0
    %1341 = vmatprep.subr.bf16.mxu0 0
    %1342 = vmatpush1.bf16.msra.mxu0 0
    %1343 = vmatprep.subr.bf16.mxu0 0
    %1344 = vmatpush1.bf16.msra.mxu0 0
    %1345 = vmatprep.subr.bf16.mxu0 0
    %1346 = vmatpush1.bf16.msra.mxu0 0
    %1347 = vmatprep.subr.bf16.mxu0 0
    %1348 = vmatpush1.bf16.msra.mxu0 0
    %1349 = vmatprep.mubr.bf16.mxu0 0
    %1350 = vmatmul.mubr.bf16.gmra.mrb[0].mxu0 %v1274
    %v1351 = vpop.f32.mrb[0].mxu0
    %v1352 = vadd.f32 %v144, %v1351
    %v1353 = vpop.f32.mrb[0].mxu0
    %v1354 = vpop.f32.mrb[0].mxu0
    %v1355 = vpop.f32.mrb[0].mxu0
    %1356 = vdwg.mxu0
    %1357 = vmatprep.subr.bf16.mxu0 %v356
    %1358 = vmatpush1.bf16.msra.mxu0 %v355
    %1359 = vmatprep.subr.bf16.mxu0 %v359
    %1360 = vmatpush1.bf16.msra.mxu0 %v358
    %1361 = vmatprep.subr.bf16.mxu0 %v362
    %1362 = vmatpush1.bf16.msra.mxu0 %v361
    %1363 = vmatprep.subr.bf16.mxu0 %v365
    %1364 = vmatpush1.bf16.msra.mxu0 %v364
    %1365 = vmatprep.subr.bf16.mxu0 %v368
    %1366 = vmatpush1.bf16.msra.mxu0 %v367
    %1367 = vmatprep.subr.bf16.mxu0 %v371
    %1368 = vmatpush1.bf16.msra.mxu0 %v370
    %1369 = vmatprep.subr.bf16.mxu0 %v374
    %1370 = vmatpush1.bf16.msra.mxu0 %v373
    %1371 = vmatprep.subr.bf16.mxu0 %v377
    %1372 = vmatpush1.bf16.msra.mxu0 %v376
    %1373 = vmatprep.subr.bf16.mxu0 0
    %1374 = vmatpush1.bf16.msra.mxu0 0
    %1375 = vmatprep.subr.bf16.mxu0 0
    %1376 = vmatpush1.bf16.msra.mxu0 0
    %1377 = vmatprep.subr.bf16.mxu0 0
    %1378 = vmatpush1.bf16.msra.mxu0 0
    %1379 = vmatprep.subr.bf16.mxu0 0
    %1380 = vmatpush1.bf16.msra.mxu0 0
    %1381 = vmatprep.subr.bf16.mxu0 0
    %1382 = vmatpush1.bf16.msra.mxu0 0
    %1383 = vmatprep.subr.bf16.mxu0 0
    %1384 = vmatpush1.bf16.msra.mxu0 0
    %1385 = vmatprep.subr.bf16.mxu0 0
    %1386 = vmatpush1.bf16.msra.mxu0 0
    %1387 = vmatprep.subr.bf16.mxu0 0
    %1388 = vmatpush1.bf16.msra.mxu0 0
    %1389 = vmatprep.mubr.bf16.mxu0 0
    %1390 = vmatmul.mubr.bf16.gmra.mrb[0].mxu0 %v1268
    %v1391 = vpop.f32.mrb[0].mxu0
    %v1392 = vadd.f32 0.0, %v1391
    %v1393 = vpop.f32.mrb[0].mxu0
    %v1394 = vadd.f32 0.0, %v1393
    %v1395 = vpop.f32.mrb[0].mxu0
    %v1396 = vpop.f32.mrb[0].mxu0
    %1397 = vdwg.mxu0
    %1398 = vmatprep.subr.bf16.mxu0 0
    %1399 = vmatpush1.bf16.msra.mxu0 %v357
    %1400 = vmatprep.subr.bf16.mxu0 0
    %1401 = vmatpush1.bf16.msra.mxu0 %v360
    %1402 = vmatprep.subr.bf16.mxu0 0
    %1403 = vmatpush1.bf16.msra.mxu0 %v363
    %1404 = vmatprep.subr.bf16.mxu0 0
    %1405 = vmatpush1.bf16.msra.mxu0 %v366
    %1406 = vmatprep.subr.bf16.mxu0 0
    %1407 = vmatpush1.bf16.msra.mxu0 %v369
    %1408 = vmatprep.subr.bf16.mxu0 0
    %1409 = vmatpush1.bf16.msra.mxu0 %v372
    %1410 = vmatprep.subr.bf16.mxu0 0
    %1411 = vmatpush1.bf16.msra.mxu0 %v375
    %1412 = vmatprep.subr.bf16.mxu0 0
    %1413 = vmatpush1.bf16.msra.mxu0 %v378
    %1414 = vmatprep.subr.bf16.mxu0 0
    %1415 = vmatpush1.bf16.msra.mxu0 0
    %1416 = vmatprep.subr.bf16.mxu0 0
    %1417 = vmatpush1.bf16.msra.mxu0 0
    %1418 = vmatprep.subr.bf16.mxu0 0
    %1419 = vmatpush1.bf16.msra.mxu0 0
    %1420 = vmatprep.subr.bf16.mxu0 0
    %1421 = vmatpush1.bf16.msra.mxu0 0
    %1422 = vmatprep.subr.bf16.mxu0 0
    %1423 = vmatpush1.bf16.msra.mxu0 0
    %1424 = vmatprep.subr.bf16.mxu0 0
    %1425 = vmatpush1.bf16.msra.mxu0 0
    %1426 = vmatprep.subr.bf16.mxu0 0
    %1427 = vmatpush1.bf16.msra.mxu0 0
    %1428 = vmatprep.subr.bf16.mxu0 0
    %1429 = vmatpush1.bf16.msra.mxu0 0
    %1430 = vmatprep.mubr.bf16.mxu0 0
    %1431 = vmatmul.mubr.bf16.gmra.mrb[0].mxu0 %v1268
    %v1432 = vpop.f32.mrb[0].mxu0
    %v1433 = vadd.f32 0.0, %v1432
    %v1434 = vpop.f32.mrb[0].mxu0
    %v1435 = vpop.f32.mrb[0].mxu0
    %v1436 = vpop.f32.mrb[0].mxu0
    %1437 = vdwg.mxu0
    %v1438 = vadd.f32 %v1311, %v1392
    %v1439 = vxor.u32 %v1438, 2147483648
    %v1440 = vmul.f32 %v1439, 1.442695
    %v1441 = vpow.pop %v1440
    %v1442 = vadd.f32 %v1441, 1.0
    %v1443 = vrcp.pop %v1442
    %v1444 = vmul.f32 1.0, %v1443
    %v1445 = vadd.f32 %v1313, %v1394
    %v1446 = vxor.u32 %v1445, 2147483648
    %v1447 = vmul.f32 %v1446, 1.442695
    %v1448 = vpow.pop %v1447
    %v1449 = vadd.f32 %v1448, 1.0
    %v1450 = vrcp.pop %v1449
    %v1451 = vmul.f32 1.0, %v1450
    %v1452 = vadd.f32 %v1433, %v153
    %v1453 = vmul.f32 %v1444, %v1452
    %v1454 = vadd.f32 %v1352, %v1453
    %v1455 = vtanh.pop %v1454
    %v1456 = vsub.f32 %v1267, %v1455
    %v1457 = vmul.f32 %v1451, %v1456
    %v1458 = vadd.f32 %v1455, %v1457
    %v1459 = vpack.c.bf16 %v1458, %v1458
    %s1460 = scalar_lea.vmem [#allocation12], 20
    %1461 = vst [vmem:[%s1460] sm:$0xf] %v1459
    %s1462 = scalar_lea.vmem [#allocation3], 24
    %v1463 = vld [vmem:[%s1462] sm:$0xf]
    %v1465 = vsel %vm190, %v1463, 0
    %1467 = vmatprep.subr.bf16.mxu0 %v179
    %1468 = vmatpush1.bf16.msra.mxu0 %v178
    %1469 = vmatprep.subr.bf16.mxu0 %v182
    %1470 = vmatpush1.bf16.msra.mxu0 %v181
    %1471 = vmatprep.subr.bf16.mxu0 0
    %1472 = vmatpush1.bf16.msra.mxu0 0
    %1473 = vmatprep.subr.bf16.mxu0 0
    %1474 = vmatpush1.bf16.msra.mxu0 0
    %1475 = vmatprep.subr.bf16.mxu0 0
    %1476 = vmatpush1.bf16.msra.mxu0 0
    %1477 = vmatprep.subr.bf16.mxu0 0
    %1478 = vmatpush1.bf16.msra.mxu0 0
    %1479 = vmatprep.subr.bf16.mxu0 0
    %1480 = vmatpush1.bf16.msra.mxu0 0
    %1481 = vmatprep.subr.bf16.mxu0 0
    %1482 = vmatpush1.bf16.msra.mxu0 0
    %1483 = vmatprep.subr.bf16.mxu0 0
    %1484 = vmatpush1.bf16.msra.mxu0 0
    %1485 = vmatprep.subr.bf16.mxu0 0
    %1486 = vmatpush1.bf16.msra.mxu0 0
    %1487 = vmatprep.subr.bf16.mxu0 0
    %1488 = vmatpush1.bf16.msra.mxu0 0
    %1489 = vmatprep.subr.bf16.mxu0 0
    %1490 = vmatpush1.bf16.msra.mxu0 0
    %1491 = vmatprep.subr.bf16.mxu0 0
    %1492 = vmatpush1.bf16.msra.mxu0 0
    %1493 = vmatprep.subr.bf16.mxu0 0
    %1494 = vmatpush1.bf16.msra.mxu0 0
    %1495 = vmatprep.subr.bf16.mxu0 0
    %1496 = vmatpush1.bf16.msra.mxu0 0
    %1497 = vmatprep.subr.bf16.mxu0 0
    %1498 = vmatpush1.bf16.msra.mxu0 0
    %1499 = vmatprep.mubr.bf16.mxu0 0
    %1500 = vmatmul.mubr.bf16.gmra.mrb[0].mxu0 %v1465
    %v1501 = vpop.f32.mrb[0].mxu0
    %v1502 = vadd.f32 %v136, %v1501
    %v1503 = vpop.f32.mrb[0].mxu0
    %v1504 = vadd.f32 %v140, %v1503
    %v1505 = vpop.f32.mrb[0].mxu0
    %v1506 = vpop.f32.mrb[0].mxu0
    %1507 = vdwg.mxu0
    %1508 = vmatprep.subr.bf16.mxu0 0
    %1509 = vmatpush1.bf16.msra.mxu0 %v180
    %1510 = vmatprep.subr.bf16.mxu0 0
    %1511 = vmatpush1.bf16.msra.mxu0 %v183
    %1512 = vmatprep.subr.bf16.mxu0 0
    %1513 = vmatpush1.bf16.msra.mxu0 0
    %1514 = vmatprep.subr.bf16.mxu0 0
    %1515 = vmatpush1.bf16.msra.mxu0 0
    %1516 = vmatprep.subr.bf16.mxu0 0
    %1517 = vmatpush1.bf16.msra.mxu0 0
    %1518 = vmatprep.subr.bf16.mxu0 0
    %1519 = vmatpush1.bf16.msra.mxu0 0
    %1520 = vmatprep.subr.bf16.mxu0 0
    %1521 = vmatpush1.bf16.msra.mxu0 0
    %1522 = vmatprep.subr.bf16.mxu0 0
    %1523 = vmatpush1.bf16.msra.mxu0 0
    %1524 = vmatprep.subr.bf16.mxu0 0
    %1525 = vmatpush1.bf16.msra.mxu0 0
    %1526 = vmatprep.subr.bf16.mxu0 0
    %1527 = vmatpush1.bf16.msra.mxu0 0
    %1528 = vmatprep.subr.bf16.mxu0 0
    %1529 = vmatpush1.bf16.msra.mxu0 0
    %1530 = vmatprep.subr.bf16.mxu0 0
    %1531 = vmatpush1.bf16.msra.mxu0 0
    %1532 = vmatprep.subr.bf16.mxu0 0
    %1533 = vmatpush1.bf16.msra.mxu0 0
    %1534 = vmatprep.subr.bf16.mxu0 0
    %1535 = vmatpush1.bf16.msra.mxu0 0
    %1536 = vmatprep.subr.bf16.mxu0 0
    %1537 = vmatpush1.bf16.msra.mxu0 0
    %1538 = vmatprep.subr.bf16.mxu0 0
    %1539 = vmatpush1.bf16.msra.mxu0 0
    %1540 = vmatprep.mubr.bf16.mxu0 0
    %1541 = vmatmul.mubr.bf16.gmra.mrb[0].mxu0 %v1465
    %v1542 = vpop.f32.mrb[0].mxu0
    %v1543 = vadd.f32 %v144, %v1542
    %v1544 = vpop.f32.mrb[0].mxu0
    %v1545 = vpop.f32.mrb[0].mxu0
    %v1546 = vpop.f32.mrb[0].mxu0
    %1547 = vdwg.mxu0
    %1548 = vmatprep.subr.bf16.mxu0 %v356
    %1549 = vmatpush1.bf16.msra.mxu0 %v355
    %1550 = vmatprep.subr.bf16.mxu0 %v359
    %1551 = vmatpush1.bf16.msra.mxu0 %v358
    %1552 = vmatprep.subr.bf16.mxu0 %v362
    %1553 = vmatpush1.bf16.msra.mxu0 %v361
    %1554 = vmatprep.subr.bf16.mxu0 %v365
    %1555 = vmatpush1.bf16.msra.mxu0 %v364
    %1556 = vmatprep.subr.bf16.mxu0 %v368
    %1557 = vmatpush1.bf16.msra.mxu0 %v367
    %1558 = vmatprep.subr.bf16.mxu0 %v371
    %1559 = vmatpush1.bf16.msra.mxu0 %v370
    %1560 = vmatprep.subr.bf16.mxu0 %v374
    %1561 = vmatpush1.bf16.msra.mxu0 %v373
    %1562 = vmatprep.subr.bf16.mxu0 %v377
    %1563 = vmatpush1.bf16.msra.mxu0 %v376
    %1564 = vmatprep.subr.bf16.mxu0 0
    %1565 = vmatpush1.bf16.msra.mxu0 0
    %1566 = vmatprep.subr.bf16.mxu0 0
    %1567 = vmatpush1.bf16.msra.mxu0 0
    %1568 = vmatprep.subr.bf16.mxu0 0
    %1569 = vmatpush1.bf16.msra.mxu0 0
    %1570 = vmatprep.subr.bf16.mxu0 0
    %1571 = vmatpush1.bf16.msra.mxu0 0
    %1572 = vmatprep.subr.bf16.mxu0 0
    %1573 = vmatpush1.bf16.msra.mxu0 0
    %1574 = vmatprep.subr.bf16.mxu0 0
    %1575 = vmatpush1.bf16.msra.mxu0 0
    %1576 = vmatprep.subr.bf16.mxu0 0
    %1577 = vmatpush1.bf16.msra.mxu0 0
    %1578 = vmatprep.subr.bf16.mxu0 0
    %1579 = vmatpush1.bf16.msra.mxu0 0
    %1580 = vmatprep.mubr.bf16.mxu0 0
    %1581 = vmatmul.mubr.bf16.gmra.mrb[0].mxu0 %v1459
    %v1582 = vpop.f32.mrb[0].mxu0
    %v1583 = vadd.f32 0.0, %v1582
    %v1584 = vpop.f32.mrb[0].mxu0
    %v1585 = vadd.f32 0.0, %v1584
    %v1586 = vpop.f32.mrb[0].mxu0
    %v1587 = vpop.f32.mrb[0].mxu0
    %1588 = vdwg.mxu0
    %1589 = vmatprep.subr.bf16.mxu0 0
    %1590 = vmatpush1.bf16.msra.mxu0 %v357
    %1591 = vmatprep.subr.bf16.mxu0 0
    %1592 = vmatpush1.bf16.msra.mxu0 %v360
    %1593 = vmatprep.subr.bf16.mxu0 0
    %1594 = vmatpush1.bf16.msra.mxu0 %v363
    %1595 = vmatprep.subr.bf16.mxu0 0
    %1596 = vmatpush1.bf16.msra.mxu0 %v366
    %1597 = vmatprep.subr.bf16.mxu0 0
    %1598 = vmatpush1.bf16.msra.mxu0 %v369
    %1599 = vmatprep.subr.bf16.mxu0 0
    %1600 = vmatpush1.bf16.msra.mxu0 %v372
    %1601 = vmatprep.subr.bf16.mxu0 0
    %1602 = vmatpush1.bf16.msra.mxu0 %v375
    %1603 = vmatprep.subr.bf16.mxu0 0
    %1604 = vmatpush1.bf16.msra.mxu0 %v378
    %1605 = vmatprep.subr.bf16.mxu0 0
    %1606 = vmatpush1.bf16.msra.mxu0 0
    %1607 = vmatprep.subr.bf16.mxu0 0
    %1608 = vmatpush1.bf16.msra.mxu0 0
    %1609 = vmatprep.subr.bf16.mxu0 0
    %1610 = vmatpush1.bf16.msra.mxu0 0
    %1611 = vmatprep.subr.bf16.mxu0 0
    %1612 = vmatpush1.bf16.msra.mxu0 0
    %1613 = vmatprep.subr.bf16.mxu0 0
    %1614 = vmatpush1.bf16.msra.mxu0 0
    %1615 = vmatprep.subr.bf16.mxu0 0
    %1616 = vmatpush1.bf16.msra.mxu0 0
    %1617 = vmatprep.subr.bf16.mxu0 0
    %1618 = vmatpush1.bf16.msra.mxu0 0
    %1619 = vmatprep.subr.bf16.mxu0 0
    %1620 = vmatpush1.bf16.msra.mxu0 0
    %1621 = vmatprep.mubr.bf16.mxu0 0
    %1622 = vmatmul.mubr.bf16.gmra.mrb[0].mxu0 %v1459
    %v1623 = vpop.f32.mrb[0].mxu0
    %v1624 = vadd.f32 0.0, %v1623
    %v1625 = vpop.f32.mrb[0].mxu0
    %v1626 = vpop.f32.mrb[0].mxu0
    %v1627 = vpop.f32.mrb[0].mxu0
    %1628 = vdwg.mxu0
    %v1629 = vadd.f32 %v1502, %v1583
    %v1630 = vxor.u32 %v1629, 2147483648
    %v1631 = vmul.f32 %v1630, 1.442695
    %v1632 = vpow.pop %v1631
    %v1633 = vadd.f32 %v1632, 1.0
    %v1634 = vrcp.pop %v1633
    %v1635 = vmul.f32 1.0, %v1634
    %v1636 = vadd.f32 %v1504, %v1585
    %v1637 = vxor.u32 %v1636, 2147483648
    %v1638 = vmul.f32 %v1637, 1.442695
    %v1639 = vpow.pop %v1638
    %v1640 = vadd.f32 %v1639, 1.0
    %v1641 = vrcp.pop %v1640
    %v1642 = vmul.f32 1.0, %v1641
    %v1643 = vadd.f32 %v1624, %v153
    %v1644 = vmul.f32 %v1635, %v1643
    %v1645 = vadd.f32 %v1543, %v1644
    %v1646 = vtanh.pop %v1645
    %v1647 = vsub.f32 %v1458, %v1646
    %v1648 = vmul.f32 %v1642, %v1647
    %v1649 = vadd.f32 %v1646, %v1648
    %v1650 = vpack.c.bf16 %v1649, %v1649
    %s1651 = scalar_lea.vmem [#allocation12], 24
    %1652 = vst [vmem:[%s1651] sm:$0xf] %v1650
    %s1653 = scalar_lea.vmem [#allocation3], 28
    %v1654 = vld [vmem:[%s1653] sm:$0xf]
    %v1656 = vsel %vm190, %v1654, 0
    %1658 = vmatprep.subr.bf16.mxu0 %v179
    %1659 = vmatpush1.bf16.msra.mxu0 %v178
    %1660 = vmatprep.subr.bf16.mxu0 %v182
    %1661 = vmatpush1.bf16.msra.mxu0 %v181
    %1662 = vmatprep.subr.bf16.mxu0 0
    %1663 = vmatpush1.bf16.msra.mxu0 0
    %1664 = vmatprep.subr.bf16.mxu0 0
    %1665 = vmatpush1.bf16.msra.mxu0 0
    %1666 = vmatprep.subr.bf16.mxu0 0
    %1667 = vmatpush1.bf16.msra.mxu0 0
    %1668 = vmatprep.subr.bf16.mxu0 0
    %1669 = vmatpush1.bf16.msra.mxu0 0
    %1670 = vmatprep.subr.bf16.mxu0 0
    %1671 = vmatpush1.bf16.msra.mxu0 0
    %1672 = vmatprep.subr.bf16.mxu0 0
    %1673 = vmatpush1.bf16.msra.mxu0 0
    %1674 = vmatprep.subr.bf16.mxu0 0
    %1675 = vmatpush1.bf16.msra.mxu0 0
    %1676 = vmatprep.subr.bf16.mxu0 0
    %1677 = vmatpush1.bf16.msra.mxu0 0
    %1678 = vmatprep.subr.bf16.mxu0 0
    %1679 = vmatpush1.bf16.msra.mxu0 0
    %1680 = vmatprep.subr.bf16.mxu0 0
    %1681 = vmatpush1.bf16.msra.mxu0 0
    %1682 = vmatprep.subr.bf16.mxu0 0
    %1683 = vmatpush1.bf16.msra.mxu0 0
    %1684 = vmatprep.subr.bf16.mxu0 0
    %1685 = vmatpush1.bf16.msra.mxu0 0
    %1686 = vmatprep.subr.bf16.mxu0 0
    %1687 = vmatpush1.bf16.msra.mxu0 0
    %1688 = vmatprep.subr.bf16.mxu0 0
    %1689 = vmatpush1.bf16.msra.mxu0 0
    %1690 = vmatprep.mubr.bf16.mxu0 0
    %1691 = vmatmul.mubr.bf16.gmra.mrb[0].mxu0 %v1656
    %v1692 = vpop.f32.mrb[0].mxu0
    %v1693 = vadd.f32 %v136, %v1692
    %v1694 = vpop.f32.mrb[0].mxu0
    %v1695 = vadd.f32 %v140, %v1694
    %v1696 = vpop.f32.mrb[0].mxu0
    %v1697 = vpop.f32.mrb[0].mxu0
    %1698 = vdwg.mxu0
    %1699 = vmatprep.subr.bf16.mxu0 0
    %1700 = vmatpush1.bf16.msra.mxu0 %v180
    %1701 = vmatprep.subr.bf16.mxu0 0
    %1702 = vmatpush1.bf16.msra.mxu0 %v183
    %1703 = vmatprep.subr.bf16.mxu0 0
    %1704 = vmatpush1.bf16.msra.mxu0 0
    %1705 = vmatprep.subr.bf16.mxu0 0
    %1706 = vmatpush1.bf16.msra.mxu0 0
    %1707 = vmatprep.subr.bf16.mxu0 0
    %1708 = vmatpush1.bf16.msra.mxu0 0
    %1709 = vmatprep.subr.bf16.mxu0 0
    %1710 = vmatpush1.bf16.msra.mxu0 0
    %1711 = vmatprep.subr.bf16.mxu0 0
    %1712 = vmatpush1.bf16.msra.mxu0 0
    %1713 = vmatprep.subr.bf16.mxu0 0
    %1714 = vmatpush1.bf16.msra.mxu0 0
    %1715 = vmatprep.subr.bf16.mxu0 0
    %1716 = vmatpush1.bf16.msra.mxu0 0
    %1717 = vmatprep.subr.bf16.mxu0 0
    %1718 = vmatpush1.bf16.msra.mxu0 0
    %1719 = vmatprep.subr.bf16.mxu0 0
    %1720 = vmatpush1.bf16.msra.mxu0 0
    %1721 = vmatprep.subr.bf16.mxu0 0
    %1722 = vmatpush1.bf16.msra.mxu0 0
    %1723 = vmatprep.subr.bf16.mxu0 0
    %1724 = vmatpush1.bf16.msra.mxu0 0
    %1725 = vmatprep.subr.bf16.mxu0 0
    %1726 = vmatpush1.bf16.msra.mxu0 0
    %1727 = vmatprep.subr.bf16.mxu0 0
    %1728 = vmatpush1.bf16.msra.mxu0 0
    %1729 = vmatprep.subr.bf16.mxu0 0
    %1730 = vmatpush1.bf16.msra.mxu0 0
    %1731 = vmatprep.mubr.bf16.mxu0 0
    %1732 = vmatmul.mubr.bf16.gmra.mrb[0].mxu0 %v1656
    %v1733 = vpop.f32.mrb[0].mxu0
    %v1734 = vadd.f32 %v144, %v1733
    %v1735 = vpop.f32.mrb[0].mxu0
    %v1736 = vpop.f32.mrb[0].mxu0
    %v1737 = vpop.f32.mrb[0].mxu0
    %1738 = vdwg.mxu0
    %1739 = vmatprep.subr.bf16.mxu0 %v356
    %1740 = vmatpush1.bf16.msra.mxu0 %v355
    %1741 = vmatprep.subr.bf16.mxu0 %v359
    %1742 = vmatpush1.bf16.msra.mxu0 %v358
    %1743 = vmatprep.subr.bf16.mxu0 %v362
    %1744 = vmatpush1.bf16.msra.mxu0 %v361
    %1745 = vmatprep.subr.bf16.mxu0 %v365
    %1746 = vmatpush1.bf16.msra.mxu0 %v364
    %1747 = vmatprep.subr.bf16.mxu0 %v368
    %1748 = vmatpush1.bf16.msra.mxu0 %v367
    %1749 = vmatprep.subr.bf16.mxu0 %v371
    %1750 = vmatpush1.bf16.msra.mxu0 %v370
    %1751 = vmatprep.subr.bf16.mxu0 %v374
    %1752 = vmatpush1.bf16.msra.mxu0 %v373
    %1753 = vmatprep.subr.bf16.mxu0 %v377
    %1754 = vmatpush1.bf16.msra.mxu0 %v376
    %1755 = vmatprep.subr.bf16.mxu0 0
    %1756 = vmatpush1.bf16.msra.mxu0 0
    %1757 = vmatprep.subr.bf16.mxu0 0
    %1758 = vmatpush1.bf16.msra.mxu0 0
    %1759 = vmatprep.subr.bf16.mxu0 0
    %1760 = vmatpush1.bf16.msra.mxu0 0
    %1761 = vmatprep.subr.bf16.mxu0 0
    %1762 = vmatpush1.bf16.msra.mxu0 0
    %1763 = vmatprep.subr.bf16.mxu0 0
    %1764 = vmatpush1.bf16.msra.mxu0 0
    %1765 = vmatprep.subr.bf16.mxu0 0
    %1766 = vmatpush1.bf16.msra.mxu0 0
    %1767 = vmatprep.subr.bf16.mxu0 0
    %1768 = vmatpush1.bf16.msra.mxu0 0
    %1769 = vmatprep.subr.bf16.mxu0 0
    %1770 = vmatpush1.bf16.msra.mxu0 0
    %1771 = vmatprep.mubr.bf16.mxu0 0
    %1772 = vmatmul.mubr.bf16.gmra.mrb[0].mxu0 %v1650
    %v1773 = vpop.f32.mrb[0].mxu0
    %v1774 = vadd.f32 0.0, %v1773
    %v1775 = vpop.f32.mrb[0].mxu0
    %v1776 = vadd.f32 0.0, %v1775
    %v1777 = vpop.f32.mrb[0].mxu0
    %v1778 = vpop.f32.mrb[0].mxu0
    %1779 = vdwg.mxu0
    %1780 = vmatprep.subr.bf16.mxu0 0
    %1781 = vmatpush1.bf16.msra.mxu0 %v357
    %1782 = vmatprep.subr.bf16.mxu0 0
    %1783 = vmatpush1.bf16.msra.mxu0 %v360
    %1784 = vmatprep.subr.bf16.mxu0 0
    %1785 = vmatpush1.bf16.msra.mxu0 %v363
    %1786 = vmatprep.subr.bf16.mxu0 0
    %1787 = vmatpush1.bf16.msra.mxu0 %v366
    %1788 = vmatprep.subr.bf16.mxu0 0
    %1789 = vmatpush1.bf16.msra.mxu0 %v369
    %1790 = vmatprep.subr.bf16.mxu0 0
    %1791 = vmatpush1.bf16.msra.mxu0 %v372
    %1792 = vmatprep.subr.bf16.mxu0 0
    %1793 = vmatpush1.bf16.msra.mxu0 %v375
    %1794 = vmatprep.subr.bf16.mxu0 0
    %1795 = vmatpush1.bf16.msra.mxu0 %v378
    %1796 = vmatprep.subr.bf16.mxu0 0
    %1797 = vmatpush1.bf16.msra.mxu0 0
    %1798 = vmatprep.subr.bf16.mxu0 0
    %1799 = vmatpush1.bf16.msra.mxu0 0
    %1800 = vmatprep.subr.bf16.mxu0 0
    %1801 = vmatpush1.bf16.msra.mxu0 0
    %1802 = vmatprep.subr.bf16.mxu0 0
    %1803 = vmatpush1.bf16.msra.mxu0 0
    %1804 = vmatprep.subr.bf16.mxu0 0
    %1805 = vmatpush1.bf16.msra.mxu0 0
    %1806 = vmatprep.subr.bf16.mxu0 0
    %1807 = vmatpush1.bf16.msra.mxu0 0
    %1808 = vmatprep.subr.bf16.mxu0 0
    %1809 = vmatpush1.bf16.msra.mxu0 0
    %1810 = vmatprep.subr.bf16.mxu0 0
    %1811 = vmatpush1.bf16.msra.mxu0 0
    %1812 = vmatprep.mubr.bf16.mxu0 0
    %1813 = vmatmul.mubr.bf16.gmra.mrb[0].mxu0 %v1650
    %v1814 = vpop.f32.mrb[0].mxu0
    %v1815 = vadd.f32 0.0, %v1814
    %v1816 = vpop.f32.mrb[0].mxu0
    %v1817 = vpop.f32.mrb[0].mxu0
    %v1818 = vpop.f32.mrb[0].mxu0
    %1819 = vdwg.mxu0
    %v1820 = vadd.f32 %v1693, %v1774
    %v1821 = vxor.u32 %v1820, 2147483648
    %v1822 = vmul.f32 %v1821, 1.442695
    %v1823 = vpow.pop %v1822
    %v1824 = vadd.f32 %v1823, 1.0
    %v1825 = vrcp.pop %v1824
    %v1826 = vmul.f32 1.0, %v1825
    %v1827 = vadd.f32 %v1695, %v1776
    %v1828 = vxor.u32 %v1827, 2147483648
    %v1829 = vmul.f32 %v1828, 1.442695
    %v1830 = vpow.pop %v1829
    %v1831 = vadd.f32 %v1830, 1.0
    %v1832 = vrcp.pop %v1831
    %v1833 = vmul.f32 1.0, %v1832
    %v1834 = vadd.f32 %v1815, %v153
    %v1835 = vmul.f32 %v1826, %v1834
    %v1836 = vadd.f32 %v1734, %v1835
    %v1837 = vtanh.pop %v1836
    %v1838 = vsub.f32 %v1649, %v1837
    %v1839 = vmul.f32 %v1833, %v1838
    %v1840 = vadd.f32 %v1837, %v1839
    %v1841 = vpack.c.bf16 %v1840, %v1840
    %s1842 = scalar_lea.vmem [#allocation12], 28
    %1843 = vst [vmem:[%s1842] sm:$0xf] %v1841
    %1844 = vst [vmem:[#allocation2] sm:$0xff] %v1840
    // Predicated region
    $region46: #{gru_item_event_forward.2} parent=1 // pred_check
      _
    $region47: #{gru_item_event_forward.2} parent=1 // pred_check_branch
      %1846 = sbr.rel (0) target = $region49
    $region48: #{gru_item_event_forward.2} parent=1 // pred_region
      %s1848 = ssub.s32 512, 512
      %1849 = vsyncadd [#allocation5], %s1848
      %s1850 = sshll.u32 [#allocation12], 4
      %s1851 = int_to_ptr.vmem [resolvable:$true] %s1850
      %1856 = dma.vmem_to_hbm [thread:$0]  %s1851, 512, %s5, [#allocation5], 64, 64, 4
    $region49: #{gru_item_event_forward.2} parent=1 // pred_fallthru
      _
    // Predicated region
    $region50: #{gru_item_event_forward.2} parent=1 // pred_check
      _
    $region51: #{gru_item_event_forward.2} parent=1 // pred_check_branch
      %1858 = sbr.rel (0) target = $region53
    $region52: #{gru_item_event_forward.2} parent=1 // pred_region
      %1859 = dma.done [#allocation5], 512
    $region53: #{gru_item_event_forward.2} parent=1 // pred_fallthru
      _
    %1860 = vsyncpa [#allocation4], 1
    %1861 = vsyncpa [#allocation7], 1
    %1862 = vsyncpa [#allocation10], 1
    %1863 = vsyncpa [#allocation5], 1

</llo_original>
